<compile_context>
chip_gen: v7x
topology: tpu7x:2x2x1
jax: 0.10.0
libtpu: 0.0.40
codegen_flags: <defaults>
</compile_context>

<pallas_src>
import functools

import jax
import jax.numpy as jnp
from jax import lax
from jax.experimental import pallas as pl
from jax.experimental.pallas import tpu as pltpu

K_TAPS = 7
C_LIST = [6, 16, 32, 64, 128]
S_LIST = [1, 1, 1, 1]
P_LIST = [3, 3, 3, 3]
PAD = 3
BN_EPS = 1e-5
_INV_SQRT2 = 0.7071067811865476
_LEFT = 8          # sublane-aligned start halo of every staging buffer (>= K-1 and >= PAD)


def _layer_plans():
    plans = []
    for l in range(len(C_LIST) - 1):
        cin, cout = C_LIST[l], C_LIST[l + 1]
        g = min(K_TAPS, 128 // cin)          # taps packed per 128-lane group
        ng = -(-K_TAPS // g)                 # grouped matmuls for this layer
        plans.append(dict(cin=cin, cout=cout, g=g, ng=ng, gw=g * cin))
    return tuple(plans)


_PLANS = _layer_plans()


def _buf_len(plan, L):
    # Grouped matmuls read buffer rows [_LEFT-PAD, _LEFT + L + (ng-1)*g - PAD).
    return _LEFT + L + max(0, (plan["ng"] - 1) * plan["g"] - PAD)


def _fused_cnn_kernel(x_ref, w0, w1, w2, w3, sc_ref, bi_ref, o_ref,
                      r0, r1, r2, r3, *, plans, L, emit_ncl):
    """All 4 Conv+BN+GELU layers fused; one grid step = TB batch elements.

    x_ref:   (TB, L, 6)              raw input tile (f32, NLC)
    w{l}:    (ng_l, gw_l, cout_l)    per-layer grouped im2col weights (bf16)
    sc_ref:  (4, 128)                folded BN scale (f32, zero padded)
    bi_ref:  (4, 128)                folded conv-bias + BN bias (f32, zero padded)
    o_ref:   (TB, L, 128) NLC  or  (TB, 128, L) NCL when emit_ncl
    r{l}:    (TB, lp_l, gw_l)        f32 shift-replicated staging buffers (VMEM)
    """
    TB = x_ref.shape[0]
    w_refs = (w0, w1, w2, w3)
    r_refs = (r0, r1, r2, r3)
    n_layers = len(plans)

    def stage(buf, val, g, slot):
        """Write `val` (TB, L, slot) into `buf` as g position-shifted copies.

        Afterwards buf[:, s, j*slot:(j+1)*slot] == val[:, s - _LEFT + j, :]
        (zero outside [0, L)), so a grouped conv matmul reads its im2col LHS as
        one contiguous lane-dense slice of `buf`.
        """
        lp, width = buf.shape[1], buf.shape[2]
        # Halo-only zeroing (<= ~8-11 rows per side); the interior is overwritten.
        buf[:, 0:_LEFT, :] = jnp.zeros((TB, _LEFT, width), buf.dtype)
        rz = _LEFT + L - 8
        buf[:, rz:lp, :] = jnp.zeros((TB, lp - rz, width), buf.dtype)
        for j in range(g):
            buf[:, _LEFT - j:_LEFT - j + L, j * slot:(j + 1) * slot] = val

    # Stage the raw input tile into layer-0's replicated buffer.
    stage(r0, x_ref[...].astype(r0.dtype), plans[0]["g"], plans[0]["cin"])

    for l in range(n_layers):                      # static unroll: 4 layers
        p = plans[l]
        g, ng, gw, cout = p["g"], p["ng"], p["gw"], p["cout"]
        r, w = r_refs[l], w_refs[l]

        acc = None
        for grp in range(ng):
            start = _LEFT + grp * g - PAD
            lhs = r[:, start:start + L, :].reshape(TB * L, gw).astype(jnp.bfloat16)
            d = jnp.dot(lhs, w[grp], preferred_element_type=jnp.float32)
            acc = d if acc is None else acc + d    # f32 accumulation

        # Folded conv-bias + BatchNorm affine, then exact (erf) GELU, all in f32.
        y = acc * sc_ref[l:l + 1, :cout] + bi_ref[l:l + 1, :cout]
        y = 0.5 * y * (1.0 + lax.erf(y * _INV_SQRT2))
        y = y.reshape(TB, L, cout)

        if l + 1 < n_layers:
            stage(r_refs[l + 1], y.astype(r_refs[l + 1].dtype),
                  plans[l + 1]["g"], cout)
        else:
            if emit_ncl:
                # Direct NCL emit: lane-dense store (L % 128 == 0), XLU transpose.
                for b in range(TB):
                    o_ref[b, :, :] = y[b].T.astype(o_ref.dtype)
            else:
                o_ref[...] = y.astype(o_ref.dtype)
    # Dropout(0.5): identity in eval mode.


def _pack_params(params):
    """Fold BN (running stats) into scale/bias; pack conv weights into per-layer
    grouped im2col matrices (bf16), matching the shift-replicated lane layout."""
    n_layers = len(params)
    Ws, scale, bias = [], jnp.zeros((n_layers, 128), jnp.float32), jnp.zeros((n_layers, 128), jnp.float32)
    for l, (prm, p) in enumerate(zip(params, _PLANS)):
        cout, cin, k = prm["w"].shape
        assert (cin, cout, k) == (p["cin"], p["cout"], K_TAPS)
        wt = jnp.transpose(prm["w"], (2, 1, 0))                     # (K, cin, cout)
        wg = jnp.zeros((p["ng"], p["gw"], cout), jnp.float32)
        for grp in range(p["ng"]):
            for j in range(p["g"]):
                kk = grp * p["g"] + j
                if kk < k:
                    wg = wg.at[grp, j * cin:(j + 1) * cin, :].set(wt[kk])
        Ws.append(wg.astype(jnp.bfloat16))
        s = prm["gamma"] * lax.rsqrt(prm["var"] + BN_EPS)
        b_eff = (prm["b"] - prm["mean"]) * s + prm["beta"]
        scale = scale.at[l, :cout].set(s)
        bias = bias.at[l, :cout].set(b_eff)
    return Ws, scale, bias


def _estimate_vmem_bytes(tb, L):
    scratch = sum(tb * _buf_len(p, L) * p["gw"] * 4 for p in _PLANS)     # f32 buffers
    x_io = 2 * tb * L * C_LIST[0] * 4                                    # double-buffered in
    out_io = 2 * tb * L * C_LIST[-1] * 4                                 # double-buffered out
    w_io = 2 * sum(p["ng"] * p["gw"] * p["cout"] * 2 for p in _PLANS)    # bf16 weights
    misc = 2 * 2 * len(_PLANS) * 128 * 4                                 # scale/bias
    return scratch + x_io + out_io + w_io + misc


def _num_cores_hint():
    try:
        kind = jax.devices()[0].device_kind.lower()
    except Exception:
        return 1
    return 2 if ("v7" in kind or "7x" in kind) else 1


def _pick_batch_tile(N, L):
    """Largest batch tile within the VMEM budget; keep >=2 grid steps only on
    2-TensorCore parts (v7x); single-core parts get the fewest, fattest steps."""
    budget = 40 * 2 ** 20
    min_steps = _num_cores_hint()
    for tb in (32, 16, 8, 4, 2, 1):
        if tb > N or N % tb:
            continue
        if _estimate_vmem_bytes(tb, L) > budget:
            continue
        if (N // tb) >= min_steps or tb == 1:
            return tb
    return 1


def _fused_forward(x_nlc, Ws, scale, bias, out_dtype):
    N, L, C0 = x_nlc.shape
    emit_ncl = (L % 128 == 0)        # lane-dense NCL store only when it stays dense
    tb = _pick_batch_tile(N, L)
    grid = (N // tb,)
    c_last = C_LIST[-1]

    kernel = functools.partial(_fused_cnn_kernel, plans=_PLANS, L=L, emit_ncl=emit_ncl)

    if emit_ncl:
        out_shape = jax.ShapeDtypeStruct((N, c_last, L), out_dtype)
        out_spec = pl.BlockSpec((tb, c_last, L), lambda n: (n, 0, 0))
    else:
        out_shape = jax.ShapeDtypeStruct((N, L, c_last), out_dtype)
        out_spec = pl.BlockSpec((tb, L, c_last), lambda n: (n, 0, 0))

    vmem_limit = int(min(48 * 2 ** 20,
                         max(16 * 2 ** 20, 1.5 * _estimate_vmem_bytes(tb, L))))

    y = pl.pallas_call(
        kernel,
        out_shape=out_shape,
        grid=grid,
        in_specs=[pl.BlockSpec((tb, L, C0), lambda n: (n, 0, 0))]
                 + [pl.BlockSpec(w.shape, lambda n: (0, 0, 0)) for w in Ws]
                 + [pl.BlockSpec(scale.shape, lambda n: (0, 0)),
                    pl.BlockSpec(bias.shape, lambda n: (0, 0))],
        out_specs=out_spec,
        scratch_shapes=[pltpu.VMEM((tb, _buf_len(p, L), p["gw"]), jnp.float32)
                        for p in _PLANS],
        compiler_params=pltpu.CompilerParams(
            dimension_semantics=("parallel",),
            vmem_limit_bytes=vmem_limit),
    )(x_nlc, *Ws, scale, bias)
    return y, emit_ncl


@functools.partial(jax.jit, static_argnames=("out_dtype",))
def cnn_encoder_forward(x_ncl, params, out_dtype=jnp.float32):
    """x_ncl: (N, C0, L) in PyTorch Conv1d layout -> (N, C_last, L)."""
    N, C0, L = x_ncl.shape
    assert C0 == C_LIST[0] and len(params) == len(_PLANS) == 4
    assert all(s == 1 for s in S_LIST) and all(2 * p == K_TAPS - 1 for p in P_LIST)
    assert L >= 8, "TODO(synk): tiny-sequence path not implemented"

    x_nlc = jnp.transpose(x_ncl, (0, 2, 1))                  # NCL -> NLC (small tensor)
    Ws, scale, bias = _pack_params(params)
    y, emit_ncl = _fused_forward(x_nlc, Ws, scale, bias, out_dtype)
    if emit_ncl:
        return y                                             # already NCL
    # TODO(synk): consumers that accept NLC can take `y` directly and skip this.
    return jnp.transpose(y, (0, 2, 1))                       # NLC -> NCL


def init_params(key):
    """Deterministic parameters for the 4 conv+BN layers (torch layouts)."""
    params = []
    for i in range(len(C_LIST) - 1):
        cin, cout, k = C_LIST[i], C_LIST[i + 1], K_TAPS
        key, kw, kb, kg, kbt, km, kv = jax.random.split(key, 7)
        w = jax.random.normal(kw, (cout, cin, k), jnp.float32) * 0.1
        b = jax.random.normal(kb, (cout,), jnp.float32) * 0.1
        gamma = 1.0 + 0.1 * jax.random.normal(kg, (cout,), jnp.float32)
        beta = 0.1 * jax.random.normal(kbt, (cout,), jnp.float32)
        mean = 0.1 * jax.random.normal(km, (cout,), jnp.float32)
        var = jnp.abs(jax.random.normal(kv, (cout,), jnp.float32)) + 0.5
        params.append(dict(w=w, b=b, gamma=gamma, beta=beta, mean=mean, var=var))
    return params


def reference_forward_f32(x_ncl, params):
    """Pure-JAX f32 reference with PyTorch op order (semantics check)."""
    x = x_ncl
    for i, p in enumerate(params):
        y = lax.conv_general_dilated(
            x, p["w"], window_strides=(S_LIST[i],),
            padding=[(P_LIST[i], P_LIST[i])],
            dimension_numbers=("NCH", "OIH", "NCH"))
        y = y + p["b"][None, :, None]
        s = p["gamma"] * lax.rsqrt(p["var"] + BN_EPS)
        y = (y - p["mean"][None, :, None]) * s[None, :, None] + p["beta"][None, :, None]
        y = 0.5 * y * (1.0 + lax.erf(y * _INV_SQRT2))
        x = y
    return x


def reference_forward_mixed(x_ncl, params):
    """Pure-JAX reference mirroring the kernel's precision policy (bf16 weights,
    bf16-rounded conv inputs, f32 accumulate / affine / GELU)."""
    x = jnp.transpose(x_ncl, (0, 2, 1)).astype(jnp.bfloat16)   # NLC, bf16
    n = len(params)
    for i, p in enumerate(params):
        wk = jnp.transpose(p["w"], (2, 1, 0)).astype(jnp.bfloat16)   # (K, Cin, Cout)
        y = lax.conv_general_dilated(
            x, wk, window_strides=(1,), padding=[(P_LIST[i], P_LIST[i])],
            dimension_numbers=("NHC", "HIO", "NHC"),
            preferred_element_type=jnp.float32)
        s = p["gamma"] * lax.rsqrt(p["var"] + BN_EPS)
        b_eff = (p["b"] - p["mean"]) * s + p["beta"]
        y = y * s[None, None, :] + b_eff[None, None, :]
        y = 0.5 * y * (1.0 + lax.erf(y * _INV_SQRT2))
        x = y.astype(jnp.bfloat16) if i + 1 < n else y
    return jnp.transpose(x, (0, 2, 1))


if __name__ == "__main__":
    key = jax.random.PRNGKey(0)
    kx1, kx2, kp = jax.random.split(key, 3)
    params = init_params(kp)

    # Test 1: small shapes; L % 128 != 0 -> kernel stores NLC, wrapper transposes.
    N, C0, L = 2, C_LIST[0], 16
    x = jax.random.normal(kx1, (N, C0, L), jnp.float32)
    out = jax.block_until_ready(cnn_encoder_forward(x, params))
    assert out.shape == (N, C_LIST[-1], L), out.shape

    ref_mixed = jax.block_until_ready(reference_forward_mixed(x, params))
    ref_f32 = jax.block_until_ready(reference_forward_f32(x, params))
    err_mixed = float(jnp.max(jnp.abs(out - ref_mixed)))
    err_f32 = float(jnp.max(jnp.abs(out - ref_f32)))
    # Tight check vs. the precision-matched reference (structural correctness).
    assert jnp.allclose(out, ref_mixed, atol=1e-2, rtol=1e-2), err_mixed
    # Loose check vs. the full-f32 PyTorch-semantics reference (bf16 MXU inputs
    # are the only source of difference).
    assert jnp.allclose(out, ref_f32, atol=1e-1, rtol=1e-1), err_f32

    # Test 2: L % 128 == 0 exercises the direct-NCL (in-kernel transpose) path.
    L2 = 128
    x2 = jax.random.normal(kx2, (N, C0, L2), jnp.float32)
    out2 = jax.block_until_ready(cnn_encoder_forward(x2, params))
    assert out2.shape == (N, C_LIST[-1], L2), out2.shape
    ref2 = jax.block_until_ready(reference_forward_mixed(x2, params))
    err2 = float(jnp.max(jnp.abs(out2 - ref2)))
    assert jnp.allclose(out2, ref2, atol=1e-2, rtol=1e-2), err2

    print("KERNEL_OK")
</pallas_src>

<mosaic_0001>
module attributes {stable_mosaic.version = 11 : i64} {
  func.func @_fused_cnn_kernel(%arg0: i32, %arg1: memref<2x16x6xf32, #tpu.memory_space<vmem>>, %arg2: memref<1x42x16xbf16, #tpu.memory_space<vmem>>, %arg3: memref<1x112x32xbf16, #tpu.memory_space<vmem>>, %arg4: memref<2x128x64xbf16, #tpu.memory_space<vmem>>, %arg5: memref<4x128x128xbf16, #tpu.memory_space<vmem>>, %arg6: memref<4x128xf32, #tpu.memory_space<vmem>>, %arg7: memref<4x128xf32, #tpu.memory_space<vmem>>, %arg8: memref<2x16x128xf32, #tpu.memory_space<vmem>>, %arg9: memref<2x24x42xf32, #tpu.memory_space<vmem>>, %arg10: memref<2x24x112xf32, #tpu.memory_space<vmem>>, %arg11: memref<2x25x128xf32, #tpu.memory_space<vmem>>, %arg12: memref<2x27x128xf32, #tpu.memory_space<vmem>>) attributes {dimension_semantics = [#tpu.dimension_semantics<parallel>], iteration_bounds = array<i64: 1>, scalar_prefetch = 0 : i64, scratch_operands = 4 : i64, tpu.core_type = #tpu.core_type<tc>, window_params = [{transform_indices = @transform_0, window_bounds = array<i64: 2, 16, 6>}, {pipeline_mode = #tpu.pipeline_mode<synchronous>, transform_indices = @transform_1, window_bounds = array<i64: 1, 42, 16>}, {pipeline_mode = #tpu.pipeline_mode<synchronous>, transform_indices = @transform_2, window_bounds = array<i64: 1, 112, 32>}, {pipeline_mode = #tpu.pipeline_mode<synchronous>, transform_indices = @transform_3, window_bounds = array<i64: 2, 128, 64>}, {pipeline_mode = #tpu.pipeline_mode<synchronous>, transform_indices = @transform_4, window_bounds = array<i64: 4, 128, 128>}, {pipeline_mode = #tpu.pipeline_mode<synchronous>, transform_indices = @transform_5, window_bounds = array<i64: 4, 128>}, {pipeline_mode = #tpu.pipeline_mode<synchronous>, transform_indices = @transform_6, window_bounds = array<i64: 4, 128>}, {transform_indices = @transform_7, window_bounds = array<i64: 2, 16, 128>}]} {
    %c0 = arith.constant 0 : index
    %c0_0 = arith.constant 0 : index
    %c0_1 = arith.constant 0 : index
    %0 = vector.load %arg1[%c0, %c0_0, %c0_1] : memref<2x16x6xf32, #tpu.memory_space<vmem>>, vector<2x16x6xf32>
    %cst = arith.constant 0.000000e+00 : f32
    %1 = vector.broadcast %cst : f32 to vector<2x8x42xf32>
    %c0_2 = arith.constant 0 : index
    %c0_3 = arith.constant 0 : index
    %c0_4 = arith.constant 0 : index
    %2 = vector.load %arg9[%c0_2, %c0_3, %c0_4] : memref<2x24x42xf32, #tpu.memory_space<vmem>>, vector<2x8x42xf32>
    tpu.vector_store %arg9[%c0_2, %c0_3, %c0_4], %1 {strides = array<i32>} : memref<2x24x42xf32, #tpu.memory_space<vmem>>, vector<2x8x42xf32>,
    %cst_5 = arith.constant 0.000000e+00 : f32
    %3 = vector.broadcast %cst_5 : f32 to vector<2x8x42xf32>
    %c0_6 = arith.constant 0 : index
    %c16 = arith.constant 16 : index
    %c0_7 = arith.constant 0 : index
    %4 = vector.load %arg9[%c0_6, %c16, %c0_7] : memref<2x24x42xf32, #tpu.memory_space<vmem>>, vector<2x8x42xf32>
    tpu.vector_store %arg9[%c0_6, %c16, %c0_7], %3 {strides = array<i32>} : memref<2x24x42xf32, #tpu.memory_space<vmem>>, vector<2x8x42xf32>,
    %c0_8 = arith.constant 0 : index
    %c8 = arith.constant 8 : index
    %c0_9 = arith.constant 0 : index
    %5 = vector.load %arg9[%c0_8, %c8, %c0_9] : memref<2x24x42xf32, #tpu.memory_space<vmem>>, vector<2x16x6xf32>
    tpu.vector_store %arg9[%c0_8, %c8, %c0_9], %0 {strides = array<i32>} : memref<2x24x42xf32, #tpu.memory_space<vmem>>, vector<2x16x6xf32>,
    %c0_10 = arith.constant 0 : index
    %c7 = arith.constant 7 : index
    %c6 = arith.constant 6 : index
    %6 = vector.load %arg9[%c0_10, %c7, %c6] : memref<2x24x42xf32, #tpu.memory_space<vmem>>, vector<2x16x6xf32>
    tpu.vector_store %arg9[%c0_10, %c7, %c6], %0 {strides = array<i32>} : memref<2x24x42xf32, #tpu.memory_space<vmem>>, vector<2x16x6xf32>,
    %c0_11 = arith.constant 0 : index
    %c6_12 = arith.constant 6 : index
    %c12 = arith.constant 12 : index
    %7 = vector.load %arg9[%c0_11, %c6_12, %c12] : memref<2x24x42xf32, #tpu.memory_space<vmem>>, vector<2x16x6xf32>
    tpu.vector_store %arg9[%c0_11, %c6_12, %c12], %0 {strides = array<i32>} : memref<2x24x42xf32, #tpu.memory_space<vmem>>, vector<2x16x6xf32>,
    %c0_13 = arith.constant 0 : index
    %c5 = arith.constant 5 : index
    %c18 = arith.constant 18 : index
    %8 = vector.load %arg9[%c0_13, %c5, %c18] : memref<2x24x42xf32, #tpu.memory_space<vmem>>, vector<2x16x6xf32>
    tpu.vector_store %arg9[%c0_13, %c5, %c18], %0 {strides = array<i32>} : memref<2x24x42xf32, #tpu.memory_space<vmem>>, vector<2x16x6xf32>,
    %c0_14 = arith.constant 0 : index
    %c4 = arith.constant 4 : index
    %c24 = arith.constant 24 : index
    %9 = vector.load %arg9[%c0_14, %c4, %c24] : memref<2x24x42xf32, #tpu.memory_space<vmem>>, vector<2x16x6xf32>
    tpu.vector_store %arg9[%c0_14, %c4, %c24], %0 {strides = array<i32>} : memref<2x24x42xf32, #tpu.memory_space<vmem>>, vector<2x16x6xf32>,
    %c0_15 = arith.constant 0 : index
    %c3 = arith.constant 3 : index
    %c30 = arith.constant 30 : index
    %10 = vector.load %arg9[%c0_15, %c3, %c30] : memref<2x24x42xf32, #tpu.memory_space<vmem>>, vector<2x16x6xf32>
    tpu.vector_store %arg9[%c0_15, %c3, %c30], %0 {strides = array<i32>} : memref<2x24x42xf32, #tpu.memory_space<vmem>>, vector<2x16x6xf32>,
    %c0_16 = arith.constant 0 : index
    %c2 = arith.constant 2 : index
    %c36 = arith.constant 36 : index
    %11 = vector.load %arg9[%c0_16, %c2, %c36] : memref<2x24x42xf32, #tpu.memory_space<vmem>>, vector<2x16x6xf32>
    tpu.vector_store %arg9[%c0_16, %c2, %c36], %0 {strides = array<i32>} : memref<2x24x42xf32, #tpu.memory_space<vmem>>, vector<2x16x6xf32>,
    %c0_17 = arith.constant 0 : index
    %c5_18 = arith.constant 5 : index
    %c0_19 = arith.constant 0 : index
    %12 = vector.load %arg9[%c0_17, %c5_18, %c0_19] : memref<2x24x42xf32, #tpu.memory_space<vmem>>, vector<2x16x42xf32>
    %13 = vector.shape_cast %12 : vector<2x16x42xf32> to vector<32x42xf32>
    %14 = arith.truncf %13 : vector<32x42xf32> to vector<32x42xbf16>
    %c0_20 = arith.constant 0 : index
    %c0_21 = arith.constant 0 : index
    %c0_22 = arith.constant 0 : index
    %15 = vector.load %arg2[%c0_20, %c0_21, %c0_22] : memref<1x42x16xbf16, #tpu.memory_space<vmem>>, vector<1x42x16xbf16>
    %16 = vector.shape_cast %15 : vector<1x42x16xbf16> to vector<42x16xbf16>
    %cst_23 = arith.constant dense<0.000000e+00> : vector<32x16xf32>
    %17 = tpu.matmul %14, %16, %cst_23 {dimension_numbers = #tpu.dot_dimension_numbers<[1], [0], [0], [1], [0, 0, 1, 1], [], []>} : vector<32x42xbf16>, vector<42x16xbf16>, vector<32x16xf32> -> vector<32x16xf32>
    %c0_24 = arith.constant 0 : index
    %c0_25 = arith.constant 0 : index
    %18 = vector.load %arg6[%c0_24, %c0_25] : memref<4x128xf32, #tpu.memory_space<vmem>>, vector<1x16xf32>
    %19 = vector.broadcast %18 : vector<1x16xf32> to vector<32x16xf32>
    %20 = arith.mulf %17, %19 : vector<32x16xf32>
    %c0_26 = arith.constant 0 : index
    %c0_27 = arith.constant 0 : index
    %21 = vector.load %arg7[%c0_26, %c0_27] : memref<4x128xf32, #tpu.memory_space<vmem>>, vector<1x16xf32>
    %22 = vector.broadcast %21 : vector<1x16xf32> to vector<32x16xf32>
    %23 = arith.addf %20, %22 : vector<32x16xf32>
    %cst_28 = arith.constant 5.000000e-01 : f32
    %24 = vector.broadcast %cst_28 : f32 to vector<32x16xf32>
    %25 = arith.mulf %24, %23 : vector<32x16xf32>
    %cst_29 = arith.constant 0.707106769 : f32
    %26 = vector.broadcast %cst_29 : f32 to vector<32x16xf32>
    %27 = arith.mulf %23, %26 : vector<32x16xf32>
    %28 = math.erf %27 : vector<32x16xf32>
    %cst_30 = arith.constant 1.000000e+00 : f32
    %29 = vector.broadcast %cst_30 : f32 to vector<32x16xf32>
    %30 = arith.addf %29, %28 : vector<32x16xf32>
    %31 = arith.mulf %25, %30 : vector<32x16xf32>
    %32 = vector.shape_cast %31 : vector<32x16xf32> to vector<2x16x16xf32>
    %cst_31 = arith.constant 0.000000e+00 : f32
    %33 = vector.broadcast %cst_31 : f32 to vector<2x8x112xf32>
    %c0_32 = arith.constant 0 : index
    %c0_33 = arith.constant 0 : index
    %c0_34 = arith.constant 0 : index
    %34 = vector.load %arg10[%c0_32, %c0_33, %c0_34] : memref<2x24x112xf32, #tpu.memory_space<vmem>>, vector<2x8x112xf32>
    tpu.vector_store %arg10[%c0_32, %c0_33, %c0_34], %33 {strides = array<i32>} : memref<2x24x112xf32, #tpu.memory_space<vmem>>, vector<2x8x112xf32>,
    %cst_35 = arith.constant 0.000000e+00 : f32
    %35 = vector.broadcast %cst_35 : f32 to vector<2x8x112xf32>
    %c0_36 = arith.constant 0 : index
    %c16_37 = arith.constant 16 : index
    %c0_38 = arith.constant 0 : index
    %36 = vector.load %arg10[%c0_36, %c16_37, %c0_38] : memref<2x24x112xf32, #tpu.memory_space<vmem>>, vector<2x8x112xf32>
    tpu.vector_store %arg10[%c0_36, %c16_37, %c0_38], %35 {strides = array<i32>} : memref<2x24x112xf32, #tpu.memory_space<vmem>>, vector<2x8x112xf32>,
    %c0_39 = arith.constant 0 : index
    %c8_40 = arith.constant 8 : index
    %c0_41 = arith.constant 0 : index
    %37 = vector.load %arg10[%c0_39, %c8_40, %c0_41] : memref<2x24x112xf32, #tpu.memory_space<vmem>>, vector<2x16x16xf32>
    tpu.vector_store %arg10[%c0_39, %c8_40, %c0_41], %32 {strides = array<i32>} : memref<2x24x112xf32, #tpu.memory_space<vmem>>, vector<2x16x16xf32>,
    %c0_42 = arith.constant 0 : index
    %c7_43 = arith.constant 7 : index
    %c16_44 = arith.constant 16 : index
    %38 = vector.load %arg10[%c0_42, %c7_43, %c16_44] : memref<2x24x112xf32, #tpu.memory_space<vmem>>, vector<2x16x16xf32>
    tpu.vector_store %arg10[%c0_42, %c7_43, %c16_44], %32 {strides = array<i32>} : memref<2x24x112xf32, #tpu.memory_space<vmem>>, vector<2x16x16xf32>,
    %c0_45 = arith.constant 0 : index
    %c6_46 = arith.constant 6 : index
    %c32 = arith.constant 32 : index
    %39 = vector.load %arg10[%c0_45, %c6_46, %c32] : memref<2x24x112xf32, #tpu.memory_space<vmem>>, vector<2x16x16xf32>
    tpu.vector_store %arg10[%c0_45, %c6_46, %c32], %32 {strides = array<i32>} : memref<2x24x112xf32, #tpu.memory_space<vmem>>, vector<2x16x16xf32>,
    %c0_47 = arith.constant 0 : index
    %c5_48 = arith.constant 5 : index
    %c48 = arith.constant 48 : index
    %40 = vector.load %arg10[%c0_47, %c5_48, %c48] : memref<2x24x112xf32, #tpu.memory_space<vmem>>, vector<2x16x16xf32>
    tpu.vector_store %arg10[%c0_47, %c5_48, %c48], %32 {strides = array<i32>} : memref<2x24x112xf32, #tpu.memory_space<vmem>>, vector<2x16x16xf32>,
    %c0_49 = arith.constant 0 : index
    %c4_50 = arith.constant 4 : index
    %c64 = arith.constant 64 : index
    %41 = vector.load %arg10[%c0_49, %c4_50, %c64] : memref<2x24x112xf32, #tpu.memory_space<vmem>>, vector<2x16x16xf32>
    tpu.vector_store %arg10[%c0_49, %c4_50, %c64], %32 {strides = array<i32>} : memref<2x24x112xf32, #tpu.memory_space<vmem>>, vector<2x16x16xf32>,
    %c0_51 = arith.constant 0 : index
    %c3_52 = arith.constant 3 : index
    %c80 = arith.constant 80 : index
    %42 = vector.load %arg10[%c0_51, %c3_52, %c80] : memref<2x24x112xf32, #tpu.memory_space<vmem>>, vector<2x16x16xf32>
    tpu.vector_store %arg10[%c0_51, %c3_52, %c80], %32 {strides = array<i32>} : memref<2x24x112xf32, #tpu.memory_space<vmem>>, vector<2x16x16xf32>,
    %c0_53 = arith.constant 0 : index
    %c2_54 = arith.constant 2 : index
    %c96 = arith.constant 96 : index
    %43 = vector.load %arg10[%c0_53, %c2_54, %c96] : memref<2x24x112xf32, #tpu.memory_space<vmem>>, vector<2x16x16xf32>
    tpu.vector_store %arg10[%c0_53, %c2_54, %c96], %32 {strides = array<i32>} : memref<2x24x112xf32, #tpu.memory_space<vmem>>, vector<2x16x16xf32>,
    %c0_55 = arith.constant 0 : index
    %c5_56 = arith.constant 5 : index
    %c0_57 = arith.constant 0 : index
    %44 = vector.load %arg10[%c0_55, %c5_56, %c0_57] : memref<2x24x112xf32, #tpu.memory_space<vmem>>, vector<2x16x112xf32>
    %45 = vector.shape_cast %44 : vector<2x16x112xf32> to vector<32x112xf32>
    %46 = arith.truncf %45 : vector<32x112xf32> to vector<32x112xbf16>
    %c0_58 = arith.constant 0 : index
    %c0_59 = arith.constant 0 : index
    %c0_60 = arith.constant 0 : index
    %47 = vector.load %arg3[%c0_58, %c0_59, %c0_60] : memref<1x112x32xbf16, #tpu.memory_space<vmem>>, vector<1x112x32xbf16>
    %48 = vector.shape_cast %47 : vector<1x112x32xbf16> to vector<112x32xbf16>
    %cst_61 = arith.constant dense<0.000000e+00> : vector<32x32xf32>
    %49 = tpu.matmul %46, %48, %cst_61 {dimension_numbers = #tpu.dot_dimension_numbers<[1], [0], [0], [1], [0, 0, 1, 1], [], []>} : vector<32x112xbf16>, vector<112x32xbf16>, vector<32x32xf32> -> vector<32x32xf32>
    %c1 = arith.constant 1 : index
    %c0_62 = arith.constant 0 : index
    %50 = vector.load %arg6[%c1, %c0_62] : memref<4x128xf32, #tpu.memory_space<vmem>>, vector<1x32xf32>
    %51 = vector.broadcast %50 : vector<1x32xf32> to vector<32x32xf32>
    %52 = arith.mulf %49, %51 : vector<32x32xf32>
    %c1_63 = arith.constant 1 : index
    %c0_64 = arith.constant 0 : index
    %53 = vector.load %arg7[%c1_63, %c0_64] : memref<4x128xf32, #tpu.memory_space<vmem>>, vector<1x32xf32>
    %54 = vector.broadcast %53 : vector<1x32xf32> to vector<32x32xf32>
    %55 = arith.addf %52, %54 : vector<32x32xf32>
    %cst_65 = arith.constant 5.000000e-01 : f32
    %56 = vector.broadcast %cst_65 : f32 to vector<32x32xf32>
    %57 = arith.mulf %56, %55 : vector<32x32xf32>
    %cst_66 = arith.constant 0.707106769 : f32
    %58 = vector.broadcast %cst_66 : f32 to vector<32x32xf32>
    %59 = arith.mulf %55, %58 : vector<32x32xf32>
    %60 = math.erf %59 : vector<32x32xf32>
    %cst_67 = arith.constant 1.000000e+00 : f32
    %61 = vector.broadcast %cst_67 : f32 to vector<32x32xf32>
    %62 = arith.addf %61, %60 : vector<32x32xf32>
    %63 = arith.mulf %57, %62 : vector<32x32xf32>
    %64 = vector.shape_cast %63 : vector<32x32xf32> to vector<2x16x32xf32>
    %cst_68 = arith.constant 0.000000e+00 : f32
    %65 = vector.broadcast %cst_68 : f32 to vector<2x8x128xf32>
    %c0_69 = arith.constant 0 : index
    %c0_70 = arith.constant 0 : index
    %c0_71 = arith.constant 0 : index
    %66 = vector.load %arg11[%c0_69, %c0_70, %c0_71] : memref<2x25x128xf32, #tpu.memory_space<vmem>>, vector<2x8x128xf32>
    tpu.vector_store %arg11[%c0_69, %c0_70, %c0_71], %65 {strides = array<i32>} : memref<2x25x128xf32, #tpu.memory_space<vmem>>, vector<2x8x128xf32>,
    %cst_72 = arith.constant 0.000000e+00 : f32
    %67 = vector.broadcast %cst_72 : f32 to vector<2x9x128xf32>
    %c0_73 = arith.constant 0 : index
    %c16_74 = arith.constant 16 : index
    %c0_75 = arith.constant 0 : index
    %68 = vector.load %arg11[%c0_73, %c16_74, %c0_75] : memref<2x25x128xf32, #tpu.memory_space<vmem>>, vector<2x9x128xf32>
    tpu.vector_store %arg11[%c0_73, %c16_74, %c0_75], %67 {strides = array<i32>} : memref<2x25x128xf32, #tpu.memory_space<vmem>>, vector<2x9x128xf32>,
    %c0_76 = arith.constant 0 : index
    %c8_77 = arith.constant 8 : index
    %c0_78 = arith.constant 0 : index
    %69 = vector.load %arg11[%c0_76, %c8_77, %c0_78] : memref<2x25x128xf32, #tpu.memory_space<vmem>>, vector<2x16x32xf32>
    tpu.vector_store %arg11[%c0_76, %c8_77, %c0_78], %64 {strides = array<i32>} : memref<2x25x128xf32, #tpu.memory_space<vmem>>, vector<2x16x32xf32>,
    %c0_79 = arith.constant 0 : index
    %c7_80 = arith.constant 7 : index
    %c32_81 = arith.constant 32 : index
    %70 = vector.load %arg11[%c0_79, %c7_80, %c32_81] : memref<2x25x128xf32, #tpu.memory_space<vmem>>, vector<2x16x32xf32>
    tpu.vector_store %arg11[%c0_79, %c7_80, %c32_81], %64 {strides = array<i32>} : memref<2x25x128xf32, #tpu.memory_space<vmem>>, vector<2x16x32xf32>,
    %c0_82 = arith.constant 0 : index
    %c6_83 = arith.constant 6 : index
    %c64_84 = arith.constant 64 : index
    %71 = vector.load %arg11[%c0_82, %c6_83, %c64_84] : memref<2x25x128xf32, #tpu.memory_space<vmem>>, vector<2x16x32xf32>
    tpu.vector_store %arg11[%c0_82, %c6_83, %c64_84], %64 {strides = array<i32>} : memref<2x25x128xf32, #tpu.memory_space<vmem>>, vector<2x16x32xf32>,
    %c0_85 = arith.constant 0 : index
    %c5_86 = arith.constant 5 : index
    %c96_87 = arith.constant 96 : index
    %72 = vector.load %arg11[%c0_85, %c5_86, %c96_87] : memref<2x25x128xf32, #tpu.memory_space<vmem>>, vector<2x16x32xf32>
    tpu.vector_store %arg11[%c0_85, %c5_86, %c96_87], %64 {strides = array<i32>} : memref<2x25x128xf32, #tpu.memory_space<vmem>>, vector<2x16x32xf32>,
    %c0_88 = arith.constant 0 : index
    %c5_89 = arith.constant 5 : index
    %c0_90 = arith.constant 0 : index
    %73 = vector.load %arg11[%c0_88, %c5_89, %c0_90] : memref<2x25x128xf32, #tpu.memory_space<vmem>>, vector<2x16x128xf32>
    %74 = vector.shape_cast %73 : vector<2x16x128xf32> to vector<32x128xf32>
    %75 = arith.truncf %74 : vector<32x128xf32> to vector<32x128xbf16>
    %c0_91 = arith.constant 0 : index
    %c0_92 = arith.constant 0 : index
    %c0_93 = arith.constant 0 : index
    %76 = vector.load %arg4[%c0_91, %c0_92, %c0_93] : memref<2x128x64xbf16, #tpu.memory_space<vmem>>, vector<1x128x64xbf16>
    %77 = vector.shape_cast %76 : vector<1x128x64xbf16> to vector<128x64xbf16>
    %cst_94 = arith.constant dense<0.000000e+00> : vector<32x64xf32>
    %78 = tpu.matmul %75, %77, %cst_94 {dimension_numbers = #tpu.dot_dimension_numbers<[1], [0], [0], [1], [0, 0, 1, 1], [], []>} : vector<32x128xbf16>, vector<128x64xbf16>, vector<32x64xf32> -> vector<32x64xf32>
    %c0_95 = arith.constant 0 : index
    %c9 = arith.constant 9 : index
    %c0_96 = arith.constant 0 : index
    %79 = vector.load %arg11[%c0_95, %c9, %c0_96] : memref<2x25x128xf32, #tpu.memory_space<vmem>>, vector<2x16x128xf32>
    %80 = vector.shape_cast %79 : vector<2x16x128xf32> to vector<32x128xf32>
    %81 = arith.truncf %80 : vector<32x128xf32> to vector<32x128xbf16>
    %c1_97 = arith.constant 1 : index
    %c0_98 = arith.constant 0 : index
    %c0_99 = arith.constant 0 : index
    %82 = vector.load %arg4[%c1_97, %c0_98, %c0_99] : memref<2x128x64xbf16, #tpu.memory_space<vmem>>, vector<1x128x64xbf16>
    %83 = vector.shape_cast %82 : vector<1x128x64xbf16> to vector<128x64xbf16>
    %cst_100 = arith.constant dense<0.000000e+00> : vector<32x64xf32>
    %84 = tpu.matmul %81, %83, %cst_100 {dimension_numbers = #tpu.dot_dimension_numbers<[1], [0], [0], [1], [0, 0, 1, 1], [], []>} : vector<32x128xbf16>, vector<128x64xbf16>, vector<32x64xf32> -> vector<32x64xf32>
    %85 = arith.addf %78, %84 : vector<32x64xf32>
    %c2_101 = arith.constant 2 : index
    %c0_102 = arith.constant 0 : index
    %86 = vector.load %arg6[%c2_101, %c0_102] : memref<4x128xf32, #tpu.memory_space<vmem>>, vector<1x64xf32>
    %87 = vector.broadcast %86 : vector<1x64xf32> to vector<32x64xf32>
    %88 = arith.mulf %85, %87 : vector<32x64xf32>
    %c2_103 = arith.constant 2 : index
    %c0_104 = arith.constant 0 : index
    %89 = vector.load %arg7[%c2_103, %c0_104] : memref<4x128xf32, #tpu.memory_space<vmem>>, vector<1x64xf32>
    %90 = vector.broadcast %89 : vector<1x64xf32> to vector<32x64xf32>
    %91 = arith.addf %88, %90 : vector<32x64xf32>
    %cst_105 = arith.constant 5.000000e-01 : f32
    %92 = vector.broadcast %cst_105 : f32 to vector<32x64xf32>
    %93 = arith.mulf %92, %91 : vector<32x64xf32>
    %cst_106 = arith.constant 0.707106769 : f32
    %94 = vector.broadcast %cst_106 : f32 to vector<32x64xf32>
    %95 = arith.mulf %91, %94 : vector<32x64xf32>
    %96 = math.erf %95 : vector<32x64xf32>
    %cst_107 = arith.constant 1.000000e+00 : f32
    %97 = vector.broadcast %cst_107 : f32 to vector<32x64xf32>
    %98 = arith.addf %97, %96 : vector<32x64xf32>
    %99 = arith.mulf %93, %98 : vector<32x64xf32>
    %100 = vector.shape_cast %99 : vector<32x64xf32> to vector<2x16x64xf32>
    %cst_108 = arith.constant 0.000000e+00 : f32
    %101 = vector.broadcast %cst_108 : f32 to vector<2x8x128xf32>
    %c0_109 = arith.constant 0 : index
    %c0_110 = arith.constant 0 : index
    %c0_111 = arith.constant 0 : index
    %102 = vector.load %arg12[%c0_109, %c0_110, %c0_111] : memref<2x27x128xf32, #tpu.memory_space<vmem>>, vector<2x8x128xf32>
    tpu.vector_store %arg12[%c0_109, %c0_110, %c0_111], %101 {strides = array<i32>} : memref<2x27x128xf32, #tpu.memory_space<vmem>>, vector<2x8x128xf32>,
    %cst_112 = arith.constant 0.000000e+00 : f32
    %103 = vector.broadcast %cst_112 : f32 to vector<2x11x128xf32>
    %c0_113 = arith.constant 0 : index
    %c16_114 = arith.constant 16 : index
    %c0_115 = arith.constant 0 : index
    %104 = vector.load %arg12[%c0_113, %c16_114, %c0_115] : memref<2x27x128xf32, #tpu.memory_space<vmem>>, vector<2x11x128xf32>
    tpu.vector_store %arg12[%c0_113, %c16_114, %c0_115], %103 {strides = array<i32>} : memref<2x27x128xf32, #tpu.memory_space<vmem>>, vector<2x11x128xf32>,
    %c0_116 = arith.constant 0 : index
    %c8_117 = arith.constant 8 : index
    %c0_118 = arith.constant 0 : index
    %105 = vector.load %arg12[%c0_116, %c8_117, %c0_118] : memref<2x27x128xf32, #tpu.memory_space<vmem>>, vector<2x16x64xf32>
    tpu.vector_store %arg12[%c0_116, %c8_117, %c0_118], %100 {strides = array<i32>} : memref<2x27x128xf32, #tpu.memory_space<vmem>>, vector<2x16x64xf32>,
    %c0_119 = arith.constant 0 : index
    %c7_120 = arith.constant 7 : index
    %c64_121 = arith.constant 64 : index
    %106 = vector.load %arg12[%c0_119, %c7_120, %c64_121] : memref<2x27x128xf32, #tpu.memory_space<vmem>>, vector<2x16x64xf32>
    tpu.vector_store %arg12[%c0_119, %c7_120, %c64_121], %100 {strides = array<i32>} : memref<2x27x128xf32, #tpu.memory_space<vmem>>, vector<2x16x64xf32>,
    %c0_122 = arith.constant 0 : index
    %c5_123 = arith.constant 5 : index
    %c0_124 = arith.constant 0 : index
    %107 = vector.load %arg12[%c0_122, %c5_123, %c0_124] : memref<2x27x128xf32, #tpu.memory_space<vmem>>, vector<2x16x128xf32>
    %108 = vector.shape_cast %107 : vector<2x16x128xf32> to vector<32x128xf32>
    %109 = arith.truncf %108 : vector<32x128xf32> to vector<32x128xbf16>
    %c0_125 = arith.constant 0 : index
    %c0_126 = arith.constant 0 : index
    %c0_127 = arith.constant 0 : index
    %110 = vector.load %arg5[%c0_125, %c0_126, %c0_127] : memref<4x128x128xbf16, #tpu.memory_space<vmem>>, vector<1x128x128xbf16>
    %111 = vector.shape_cast %110 : vector<1x128x128xbf16> to vector<128x128xbf16>
    %cst_128 = arith.constant dense<0.000000e+00> : vector<32x128xf32>
    %112 = tpu.matmul %109, %111, %cst_128 {dimension_numbers = #tpu.dot_dimension_numbers<[1], [0], [0], [1], [0, 0, 1, 1], [], []>} : vector<32x128xbf16>, vector<128x128xbf16>, vector<32x128xf32> -> vector<32x128xf32>
    %c0_129 = arith.constant 0 : index
    %c7_130 = arith.constant 7 : index
    %c0_131 = arith.constant 0 : index
    %113 = vector.load %arg12[%c0_129, %c7_130, %c0_131] : memref<2x27x128xf32, #tpu.memory_space<vmem>>, vector<2x16x128xf32>
    %114 = vector.shape_cast %113 : vector<2x16x128xf32> to vector<32x128xf32>
    %115 = arith.truncf %114 : vector<32x128xf32> to vector<32x128xbf16>
    %c1_132 = arith.constant 1 : index
    %c0_133 = arith.constant 0 : index
    %c0_134 = arith.constant 0 : index
    %116 = vector.load %arg5[%c1_132, %c0_133, %c0_134] : memref<4x128x128xbf16, #tpu.memory_space<vmem>>, vector<1x128x128xbf16>
    %117 = vector.shape_cast %116 : vector<1x128x128xbf16> to vector<128x128xbf16>
    %cst_135 = arith.constant dense<0.000000e+00> : vector<32x128xf32>
    %118 = tpu.matmul %115, %117, %cst_135 {dimension_numbers = #tpu.dot_dimension_numbers<[1], [0], [0], [1], [0, 0, 1, 1], [], []>} : vector<32x128xbf16>, vector<128x128xbf16>, vector<32x128xf32> -> vector<32x128xf32>
    %119 = arith.addf %112, %118 : vector<32x128xf32>
    %c0_136 = arith.constant 0 : index
    %c9_137 = arith.constant 9 : index
    %c0_138 = arith.constant 0 : index
    %120 = vector.load %arg12[%c0_136, %c9_137, %c0_138] : memref<2x27x128xf32, #tpu.memory_space<vmem>>, vector<2x16x128xf32>
    %121 = vector.shape_cast %120 : vector<2x16x128xf32> to vector<32x128xf32>
    %122 = arith.truncf %121 : vector<32x128xf32> to vector<32x128xbf16>
    %c2_139 = arith.constant 2 : index
    %c0_140 = arith.constant 0 : index
    %c0_141 = arith.constant 0 : index
    %123 = vector.load %arg5[%c2_139, %c0_140, %c0_141] : memref<4x128x128xbf16, #tpu.memory_space<vmem>>, vector<1x128x128xbf16>
    %124 = vector.shape_cast %123 : vector<1x128x128xbf16> to vector<128x128xbf16>
    %cst_142 = arith.constant dense<0.000000e+00> : vector<32x128xf32>
    %125 = tpu.matmul %122, %124, %cst_142 {dimension_numbers = #tpu.dot_dimension_numbers<[1], [0], [0], [1], [0, 0, 1, 1], [], []>} : vector<32x128xbf16>, vector<128x128xbf16>, vector<32x128xf32> -> vector<32x128xf32>
    %126 = arith.addf %119, %125 : vector<32x128xf32>
    %c0_143 = arith.constant 0 : index
    %c11 = arith.constant 11 : index
    %c0_144 = arith.constant 0 : index
    %127 = vector.load %arg12[%c0_143, %c11, %c0_144] : memref<2x27x128xf32, #tpu.memory_space<vmem>>, vector<2x16x128xf32>
    %128 = vector.shape_cast %127 : vector<2x16x128xf32> to vector<32x128xf32>
    %129 = arith.truncf %128 : vector<32x128xf32> to vector<32x128xbf16>
    %c3_145 = arith.constant 3 : index
    %c0_146 = arith.constant 0 : index
    %c0_147 = arith.constant 0 : index
    %130 = vector.load %arg5[%c3_145, %c0_146, %c0_147] : memref<4x128x128xbf16, #tpu.memory_space<vmem>>, vector<1x128x128xbf16>
    %131 = vector.shape_cast %130 : vector<1x128x128xbf16> to vector<128x128xbf16>
    %cst_148 = arith.constant dense<0.000000e+00> : vector<32x128xf32>
    %132 = tpu.matmul %129, %131, %cst_148 {dimension_numbers = #tpu.dot_dimension_numbers<[1], [0], [0], [1], [0, 0, 1, 1], [], []>} : vector<32x128xbf16>, vector<128x128xbf16>, vector<32x128xf32> -> vector<32x128xf32>
    %133 = arith.addf %126, %132 : vector<32x128xf32>
    %c3_149 = arith.constant 3 : index
    %c0_150 = arith.constant 0 : index
    %134 = vector.load %arg6[%c3_149, %c0_150] : memref<4x128xf32, #tpu.memory_space<vmem>>, vector<1x128xf32>
    %135 = vector.broadcast %134 : vector<1x128xf32> to vector<32x128xf32>
    %136 = arith.mulf %133, %135 : vector<32x128xf32>
    %c3_151 = arith.constant 3 : index
    %c0_152 = arith.constant 0 : index
    %137 = vector.load %arg7[%c3_151, %c0_152] : memref<4x128xf32, #tpu.memory_space<vmem>>, vector<1x128xf32>
    %138 = vector.broadcast %137 : vector<1x128xf32> to vector<32x128xf32>
    %139 = arith.addf %136, %138 : vector<32x128xf32>
    %cst_153 = arith.constant 5.000000e-01 : f32
    %140 = vector.broadcast %cst_153 : f32 to vector<32x128xf32>
    %141 = arith.mulf %140, %139 : vector<32x128xf32>
    %cst_154 = arith.constant 0.707106769 : f32
    %142 = vector.broadcast %cst_154 : f32 to vector<32x128xf32>
    %143 = arith.mulf %139, %142 : vector<32x128xf32>
    %144 = math.erf %143 : vector<32x128xf32>
    %cst_155 = arith.constant 1.000000e+00 : f32
    %145 = vector.broadcast %cst_155 : f32 to vector<32x128xf32>
    %146 = arith.addf %145, %144 : vector<32x128xf32>
    %147 = arith.mulf %141, %146 : vector<32x128xf32>
    %148 = vector.shape_cast %147 : vector<32x128xf32> to vector<2x16x128xf32>
    %c0_156 = arith.constant 0 : index
    %c0_157 = arith.constant 0 : index
    %c0_158 = arith.constant 0 : index
    %149 = vector.load %arg8[%c0_156, %c0_157, %c0_158] : memref<2x16x128xf32, #tpu.memory_space<vmem>>, vector<2x16x128xf32>
    tpu.vector_store %arg8[%c0_156, %c0_157, %c0_158], %148 {strides = array<i32>} : memref<2x16x128xf32, #tpu.memory_space<vmem>>, vector<2x16x128xf32>,
    return
  }
  func.func @transform_0(%arg0: i32) -> (i32, i32, i32) {
    %c0_i32 = arith.constant 0 : i32
    %c0_i32_0 = arith.constant 0 : i32
    %c0_i32_1 = arith.constant 0 : i32
    return %arg0, %c0_i32, %c0_i32_0 : i32, i32, i32
  }
  func.func @transform_1(%arg0: i32) -> (i32, i32, i32) {
    %c0_i32 = arith.constant 0 : i32
    %c0_i32_0 = arith.constant 0 : i32
    %c0_i32_1 = arith.constant 0 : i32
    %c0_i32_2 = arith.constant 0 : i32
    return %c0_i32, %c0_i32_0, %c0_i32_1 : i32, i32, i32
  }
  func.func @transform_2(%arg0: i32) -> (i32, i32, i32) {
    %c0_i32 = arith.constant 0 : i32
    %c0_i32_0 = arith.constant 0 : i32
    %c0_i32_1 = arith.constant 0 : i32
    %c0_i32_2 = arith.constant 0 : i32
    return %c0_i32, %c0_i32_0, %c0_i32_1 : i32, i32, i32
  }
  func.func @transform_3(%arg0: i32) -> (i32, i32, i32) {
    %c0_i32 = arith.constant 0 : i32
    %c0_i32_0 = arith.constant 0 : i32
    %c0_i32_1 = arith.constant 0 : i32
    %c0_i32_2 = arith.constant 0 : i32
    return %c0_i32, %c0_i32_0, %c0_i32_1 : i32, i32, i32
  }
  func.func @transform_4(%arg0: i32) -> (i32, i32, i32) {
    %c0_i32 = arith.constant 0 : i32
    %c0_i32_0 = arith.constant 0 : i32
    %c0_i32_1 = arith.constant 0 : i32
    %c0_i32_2 = arith.constant 0 : i32
    return %c0_i32, %c0_i32_0, %c0_i32_1 : i32, i32, i32
  }
  func.func @transform_5(%arg0: i32) -> (i32, i32) {
    %c0_i32 = arith.constant 0 : i32
    %c0_i32_0 = arith.constant 0 : i32
    %c0_i32_1 = arith.constant 0 : i32
    return %c0_i32, %c0_i32_0 : i32, i32
  }
  func.func @transform_6(%arg0: i32) -> (i32, i32) {
    %c0_i32 = arith.constant 0 : i32
    %c0_i32_0 = arith.constant 0 : i32
    %c0_i32_1 = arith.constant 0 : i32
    return %c0_i32, %c0_i32_0 : i32, i32
  }
  func.func @transform_7(%arg0: i32) -> (i32, i32, i32) {
    %c0_i32 = arith.constant 0 : i32
    %c0_i32_0 = arith.constant 0 : i32
    %c0_i32_1 = arith.constant 0 : i32
    return %arg0, %c0_i32, %c0_i32_0 : i32, i32, i32
  }
}

</mosaic_0001>

<llo_original>
// kernel: cnn_encoder_forward.1
$region0: #{cnn_encoder_forward.1}
  #allocation0 [shape = 'u32[]', space=smem, size = 0x4, offset = 0x4, fixed_abs, tag = 'smem constant byte address 0x4 - core index']
  #allocation1 [shape = 'u32[144,128]{1,0:T(1,128)}', space=vmem, size = 0x12000, scoped, tag = 'internal scratch']
  #allocation2 [shape = 'f32[2,24,42]{2,1,0:T(8,128)}', space=vmem, size = 0x6000, scoped, tag = 'scratch operand']
  #allocation3 [shape = 'f32[2,24,112]{2,1,0:T(8,128)}', space=vmem, size = 0x6000, scoped, tag = 'scratch operand']
  #allocation4 [shape = 'f32[2,25,128]{2,1,0:T(8,128)}', space=vmem, size = 0x8000, scoped, tag = 'scratch operand']
  #allocation5 [shape = 'f32[2,27,128]{2,1,0:T(8,128)}', space=vmem, size = 0x8000, scoped, tag = 'scratch operand']
  %s0 = inlined_call_operand.vmem [shape: f32[2,16,6], index: 0, kind: input, shape index: {}]
  %s1 = inlined_call_operand.vmem [shape: bf16[1,42,16], index: 1, kind: input, shape index: {}]
  %s2 = inlined_call_operand.vmem [shape: bf16[1,112,32], index: 2, kind: input, shape index: {}]
  %s3 = inlined_call_operand.vmem [shape: bf16[2,128,64], index: 3, kind: input, shape index: {}]
  %s4 = inlined_call_operand.vmem [shape: bf16[4,128,128], index: 4, kind: input, shape index: {}]
  %s5 = inlined_call_operand.vmem [shape: f32[4,128], index: 5, kind: input, shape index: {}]
  %s6 = inlined_call_operand.vmem [shape: f32[4,128], index: 6, kind: input, shape index: {}]
  %s7 = inlined_call_operand.hbm [shape: f32[2,16,128], index: 7, kind: output, shape index: {}]
  %s8 = sld [smem:[#allocation0]]
  $region38: #{cnn_encoder_forward.1} parent=0
    _
  %s10 = ssub.s32 1, %s8
  %s11 = scalar_select 0, %s10, %s8
  $region1: #{cnn_encoder_forward.1} parent=0
    #allocation6 [shape = 'u8[16384]{0}', space=vmem, size = 0x4000, scoped, tag = 'output window, operand 0, single buffered']
    #allocation7 [shape = 's32[1]{0}', space=sflag, size = 0x4, scoped, tag = 'scoped memory for cnn_encoder_forward.1']
    %12 = vsyncpa [#allocation7], 0
    // Predicated region
    $region2: #{cnn_encoder_forward.1} parent=1 // pred_check
      _
    $region3: #{cnn_encoder_forward.1} parent=1 // pred_check_branch
      %14 = sbr.rel (0) target = $region5
    $region4: #{cnn_encoder_forward.1} parent=1 // pred_region
      _
    $region5: #{cnn_encoder_forward.1} parent=1 // pred_fallthru
      _
    // Predicated region
    $region6: #{cnn_encoder_forward.1} parent=1 // pred_check
      _
    $region7: #{cnn_encoder_forward.1} parent=1 // pred_check_branch
      %16 = sbr.rel (0) target = $region9
    $region8: #{cnn_encoder_forward.1} parent=1 // pred_region
      _
    $region9: #{cnn_encoder_forward.1} parent=1 // pred_fallthru
      _
    // Predicated region
    $region10: #{cnn_encoder_forward.1} parent=1 // pred_check
      _
    $region11: #{cnn_encoder_forward.1} parent=1 // pred_check_branch
      %18 = sbr.rel (0) target = $region13
    $region12: #{cnn_encoder_forward.1} parent=1 // pred_region
      _
    $region13: #{cnn_encoder_forward.1} parent=1 // pred_fallthru
      _
    // Predicated region
    $region14: #{cnn_encoder_forward.1} parent=1 // pred_check
      _
    $region15: #{cnn_encoder_forward.1} parent=1 // pred_check_branch
      %20 = sbr.rel (0) target = $region17
    $region16: #{cnn_encoder_forward.1} parent=1 // pred_region
      _
    $region17: #{cnn_encoder_forward.1} parent=1 // pred_fallthru
      _
    // Predicated region
    $region18: #{cnn_encoder_forward.1} parent=1 // pred_check
      _
    $region19: #{cnn_encoder_forward.1} parent=1 // pred_check_branch
      %22 = sbr.rel (0) target = $region21
    $region20: #{cnn_encoder_forward.1} parent=1 // pred_region
      _
    $region21: #{cnn_encoder_forward.1} parent=1 // pred_fallthru
      _
    // Predicated region
    $region22: #{cnn_encoder_forward.1} parent=1 // pred_check
      _
    $region23: #{cnn_encoder_forward.1} parent=1 // pred_check_branch
      %24 = sbr.rel (0) target = $region25
    $region24: #{cnn_encoder_forward.1} parent=1 // pred_region
      _
    $region25: #{cnn_encoder_forward.1} parent=1 // pred_fallthru
      _
    // Predicated region
    $region26: #{cnn_encoder_forward.1} parent=1 // pred_check
      _
    $region27: #{cnn_encoder_forward.1} parent=1 // pred_check_branch
      %26 = sbr.rel (0) target = $region29
    $region28: #{cnn_encoder_forward.1} parent=1 // pred_region
      _
    $region29: #{cnn_encoder_forward.1} parent=1 // pred_fallthru
      _
    %v28 = vld [vmem:[%s0] sm:$0xff]
    %v29 = vld [vmem:[%s0 + $0x8] sm:$0xff]
    %v30 = vld [vmem:[%s0 + $0x10] sm:$0xff]
    %v31 = vld [vmem:[%s0 + $0x18] sm:$0xff]
    %vm32 = vcmask 343040
    %33 = vst.msk [vmem:[#allocation2] sm:$0xff] %vm32, 0.0
    %34 = vst.msk [vmem:[#allocation2 + $0x18] sm:$0xff] %vm32, 0.0
    %35 = vst.msk [vmem:[#allocation2 + $0x10] sm:$0xff] %vm32, 0.0
    %36 = vst.msk [vmem:[#allocation2 + $0x28] sm:$0xff] %vm32, 0.0
    %vm37 = vcmask 48128
    %38 = vst.msk [vmem:[#allocation2 + $0x8] sm:$0xff] %vm37, %v28
    %39 = vst.msk [vmem:[#allocation2 + $0x10] sm:$0xff] %vm37, %v29
    %40 = vst.msk [vmem:[#allocation2 + $0x20] sm:$0xff] %vm37, %v30
    %41 = vst.msk [vmem:[#allocation2 + $0x28] sm:$0xff] %vm37, %v31
    %46 = vrot.lane.b32.xlu0 %v28, 6
    %v47 = vpop.permute.xlu0 %46
    %48 = vrot.lane.b32.xlu0 %v29, 6
    %v49 = vpop.permute.xlu0 %48
    %50 = vrot.lane.b32.xlu0 %v30, 6
    %v51 = vpop.permute.xlu0 %50
    %52 = vrot.lane.b32.xlu0 %v31, 6
    %v53 = vpop.permute.xlu0 %52
    %vm58 = vcmask 97328
    %59 = vst.msk [vmem:[#allocation2 + $0x7] sm:$0xff] %vm58, %v47
    %60 = vst.msk [vmem:[#allocation2 + $0xf] sm:$0xff] %vm58, %v49
    %61 = vst.msk [vmem:[#allocation2 + $0x1f] sm:$0xff] %vm58, %v51
    %62 = vst.msk [vmem:[#allocation2 + $0x27] sm:$0xff] %vm58, %v53
    %63 = vrot.lane.b32.xlu0 %v28, 12
    %v64 = vpop.permute.xlu0 %63
    %65 = vrot.lane.b32.xlu0 %v29, 12
    %v66 = vpop.permute.xlu0 %65
    %67 = vrot.lane.b32.xlu0 %v30, 12
    %v68 = vpop.permute.xlu0 %67
    %69 = vrot.lane.b32.xlu0 %v31, 12
    %v70 = vpop.permute.xlu0 %69
    %vm75 = vcmask 146528
    %76 = vst.msk [vmem:[#allocation2 + $0x6] sm:$0xff] %vm75, %v64
    %77 = vst.msk [vmem:[#allocation2 + $0xe] sm:$0xff] %vm75, %v66
    %78 = vst.msk [vmem:[#allocation2 + $0x1e] sm:$0xff] %vm75, %v68
    %79 = vst.msk [vmem:[#allocation2 + $0x26] sm:$0xff] %vm75, %v70
    %80 = vrot.lane.b32.xlu0 %v28, 18
    %v81 = vpop.permute.xlu0 %80
    %82 = vrot.lane.b32.xlu0 %v29, 18
    %v83 = vpop.permute.xlu0 %82
    %84 = vrot.lane.b32.xlu0 %v30, 18
    %v85 = vpop.permute.xlu0 %84
    %86 = vrot.lane.b32.xlu0 %v31, 18
    %v87 = vpop.permute.xlu0 %86
    %vm92 = vcmask 195728
    %93 = vst.msk [vmem:[#allocation2 + $0x5] sm:$0xff] %vm92, %v81
    %94 = vst.msk [vmem:[#allocation2 + $0xd] sm:$0xff] %vm92, %v83
    %95 = vst.msk [vmem:[#allocation2 + $0x1d] sm:$0xff] %vm92, %v85
    %96 = vst.msk [vmem:[#allocation2 + $0x25] sm:$0xff] %vm92, %v87
    %97 = vrot.lane.b32.xlu0 %v28, 24
    %v98 = vpop.permute.xlu0 %97
    %99 = vrot.lane.b32.xlu0 %v29, 24
    %v100 = vpop.permute.xlu0 %99
    %101 = vrot.lane.b32.xlu0 %v30, 24
    %v102 = vpop.permute.xlu0 %101
    %103 = vrot.lane.b32.xlu0 %v31, 24
    %v104 = vpop.permute.xlu0 %103
    %vm109 = vcmask 244928
    %110 = vst.msk [vmem:[#allocation2 + $0x4] sm:$0xff] %vm109, %v98
    %111 = vst.msk [vmem:[#allocation2 + $0xc] sm:$0xff] %vm109, %v100
    %112 = vst.msk [vmem:[#allocation2 + $0x1c] sm:$0xff] %vm109, %v102
    %113 = vst.msk [vmem:[#allocation2 + $0x24] sm:$0xff] %vm109, %v104
    %114 = vrot.lane.b32.xlu0 %v28, 30
    %v115 = vpop.permute.xlu0 %114
    %116 = vrot.lane.b32.xlu0 %v29, 30
    %v117 = vpop.permute.xlu0 %116
    %118 = vrot.lane.b32.xlu0 %v30, 30
    %v119 = vpop.permute.xlu0 %118
    %120 = vrot.lane.b32.xlu0 %v31, 30
    %v121 = vpop.permute.xlu0 %120
    %vm126 = vcmask 294128
    %127 = vst.msk [vmem:[#allocation2 + $0x3] sm:$0xff] %vm126, %v115
    %128 = vst.msk [vmem:[#allocation2 + $0xb] sm:$0xff] %vm126, %v117
    %129 = vst.msk [vmem:[#allocation2 + $0x1b] sm:$0xff] %vm126, %v119
    %130 = vst.msk [vmem:[#allocation2 + $0x23] sm:$0xff] %vm126, %v121
    %131 = vrot.lane.b32.xlu0 %v28, 36
    %v132 = vpop.permute.xlu0 %131
    %133 = vrot.lane.b32.xlu0 %v29, 36
    %v134 = vpop.permute.xlu0 %133
    %135 = vrot.lane.b32.xlu0 %v30, 36
    %v136 = vpop.permute.xlu0 %135
    %137 = vrot.lane.b32.xlu0 %v31, 36
    %v138 = vpop.permute.xlu0 %137
    %vm143 = vcmask 343328
    %144 = vst.msk [vmem:[#allocation2 + $0x2] sm:$0xff] %vm143, %v132
    %145 = vst.msk [vmem:[#allocation2 + $0xa] sm:$0xff] %vm143, %v134
    %146 = vst.msk [vmem:[#allocation2 + $0x1a] sm:$0xff] %vm143, %v136
    %147 = vst.msk [vmem:[#allocation2 + $0x22] sm:$0xff] %vm143, %v138
    %v148 = vld [vmem:[#allocation2 + $0x5] sm:$0xff]
    %v149 = vld [vmem:[#allocation2 + $0xd] sm:$0xff]
    %v150 = vld [vmem:[#allocation2 + $0x1d] sm:$0xff]
    %v151 = vld [vmem:[#allocation2 + $0x25] sm:$0xff]
    %v152 = vpack.c.bf16 %v149, %v148
    %v153 = vpack.c.bf16 %v151, %v150
    %v154 = vld [vmem:[%s1] sm:$0xf]
    %v155 = vld [vmem:[%s1 + $0x4] sm:$0xf]
    %v156 = vld [vmem:[%s1 + $0x8] sm:$0xf]
    %v157 = vld [vmem:[%s1 + $0xc] sm:$0xf]
    %v158 = vld [vmem:[%s1 + $0x10] sm:$0xf]
    %v159 = vld [vmem:[%s1 + $0x14] sm:$0x1]
    %v166 = vunpack.c.l.b16 %v154
    %v167 = vunpack.c.l.b16 %v155
    %v168 = vunpack.c.l.b16 %v156
    %v169 = vunpack.c.l.b16 %v157
    %v170 = vunpack.c.l.b16 %v158
    %v171 = vunpack.c.l.b16 %v159
    %v172 = vpack.c.b16 %v167, %v166
    %v173 = vpack.c.b16 %v169, %v168
    %v174 = vpack.c.b16 %v171, %v170
    %v178 = vsel %vm32, %v152, 0
    %v181 = vsel %vm32, %v153, 0
    %vm183 = vcmask 1044480
    %v185 = vsel %vm183, %v174, 0
    %187 = vmatprep.subr.bf16.mxu0 0
    %188 = vmatpush1.bf16.msra.mxu0 %v172
    %189 = vmatprep.subr.bf16.mxu0 0
    %190 = vmatpush1.bf16.msra.mxu0 %v173
    %191 = vmatprep.subr.bf16.mxu0 0
    %192 = vmatpush1.bf16.msra.mxu0 %v185
    %193 = vmatprep.subr.bf16.mxu0 0
    %194 = vmatpush1.bf16.msra.mxu0 0
    %195 = vmatprep.subr.bf16.mxu0 0
    %196 = vmatpush1.bf16.msra.mxu0 0
    %197 = vmatprep.subr.bf16.mxu0 0
    %198 = vmatpush1.bf16.msra.mxu0 0
    %199 = vmatprep.subr.bf16.mxu0 0
    %200 = vmatpush1.bf16.msra.mxu0 0
    %201 = vmatprep.subr.bf16.mxu0 0
    %202 = vmatpush1.bf16.msra.mxu0 0
    %203 = vmatprep.subr.bf16.mxu0 0
    %204 = vmatpush1.bf16.msra.mxu0 0
    %205 = vmatprep.subr.bf16.mxu0 0
    %206 = vmatpush1.bf16.msra.mxu0 0
    %207 = vmatprep.subr.bf16.mxu0 0
    %208 = vmatpush1.bf16.msra.mxu0 0
    %209 = vmatprep.subr.bf16.mxu0 0
    %210 = vmatpush1.bf16.msra.mxu0 0
    %211 = vmatprep.subr.bf16.mxu0 0
    %212 = vmatpush1.bf16.msra.mxu0 0
    %213 = vmatprep.subr.bf16.mxu0 0
    %214 = vmatpush1.bf16.msra.mxu0 0
    %215 = vmatprep.subr.bf16.mxu0 0
    %216 = vmatpush1.bf16.msra.mxu0 0
    %217 = vmatprep.subr.bf16.mxu0 0
    %218 = vmatpush1.bf16.msra.mxu0 0
    %219 = vmatprep.mubr.bf16.mxu0 0
    %220 = vmatmul.mubr.bf16.gmra.mrb[0].mxu0 %v178
    %v221 = vpop.f32.mrb[0].mxu0
    %v222 = vadd.f32 0.0, %v221
    %v223 = vpop.f32.mrb[0].mxu0
    %v224 = vpop.f32.mrb[0].mxu0
    %v225 = vadd.f32 0.0, %v224
    %v226 = vpop.f32.mrb[0].mxu0
    %227 = vmatprep.mubr.bf16.mxu0 0
    %228 = vmatmul.mubr.bf16.gmra.mrb[0].mxu0 %v181
    %v229 = vpop.f32.mrb[0].mxu0
    %v230 = vadd.f32 0.0, %v229
    %v231 = vpop.f32.mrb[0].mxu0
    %v232 = vpop.f32.mrb[0].mxu0
    %v233 = vadd.f32 0.0, %v232
    %v234 = vpop.f32.mrb[0].mxu0
    %235 = vdwg.mxu0
    %v236 = vld [vmem:[%s5] sm:$0x1]
    %v237 = vlaneseq
    %v238 = vshrl.u32 %v237, 7
    %v239 = vsub.s32 0, %v238
    %v240 = vrot.slane %v236, %v239
    %v241 = vmul.f32 %v222, %v240
    %v242 = vmul.f32 %v225, %v240
    %v243 = vmul.f32 %v230, %v240
    %v244 = vmul.f32 %v233, %v240
    %v245 = vld [vmem:[%s6] sm:$0x1]
    %v246 = vlaneseq
    %v247 = vshrl.u32 %v246, 7
    %v248 = vsub.s32 0, %v247
    %v249 = vrot.slane %v245, %v248
    %v250 = vadd.f32 %v241, %v249
    %v251 = vadd.f32 %v242, %v249
    %v252 = vadd.f32 %v243, %v249
    %v253 = vadd.f32 %v244, %v249
    %v254 = vmul.f32 %v250, 0.5
    %v255 = vmul.f32 %v251, 0.5
    %v256 = vmul.f32 %v252, 0.5
    %v257 = vmul.f32 %v253, 0.5
    %v258 = vmul.f32 %v250, 0.70710677
    %v259 = vmul.f32 %v251, 0.70710677
    %v260 = vmul.f32 %v252, 0.70710677
    %v261 = vmul.f32 %v253, 0.70710677
    %v262 = verf.f32.pop %v258
    %v263 = verf.f32.pop %v259
    %v264 = verf.f32.pop %v260
    %v265 = verf.f32.pop %v261
    %v266 = vadd.f32 %v262, 1.0
    %v267 = vadd.f32 %v263, 1.0
    %v268 = vadd.f32 %v264, 1.0
    %v269 = vadd.f32 %v265, 1.0
    %v270 = vmul.f32 %v254, %v266
    %v271 = vmul.f32 %v255, %v267
    %v272 = vmul.f32 %v256, %v268
    %v273 = vmul.f32 %v257, %v269
    %vm274 = vcmask 916480
    %275 = vst.msk [vmem:[#allocation3] sm:$0xff] %vm274, 0.0
    %276 = vst.msk [vmem:[#allocation3 + $0x18] sm:$0xff] %vm274, 0.0
    %277 = vst.msk [vmem:[#allocation3 + $0x10] sm:$0xff] %vm274, 0.0
    %278 = vst.msk [vmem:[#allocation3 + $0x28] sm:$0xff] %vm274, 0.0
    %vm279 = vcmask 130048
    %280 = vst.msk [vmem:[#allocation3 + $0x8] sm:$0xff] %vm279, %v270
    %281 = vst.msk [vmem:[#allocation3 + $0x10] sm:$0xff] %vm279, %v271
    %282 = vst.msk [vmem:[#allocation3 + $0x20] sm:$0xff] %vm279, %v272
    %283 = vst.msk [vmem:[#allocation3 + $0x28] sm:$0xff] %vm279, %v273
    %288 = vrot.lane.b32.xlu0 %v270, 16
    %v289 = vpop.permute.xlu0 %288
    %290 = vrot.lane.b32.xlu0 %v271, 16
    %v291 = vpop.permute.xlu0 %290
    %292 = vrot.lane.b32.xlu0 %v272, 16
    %v293 = vpop.permute.xlu0 %292
    %294 = vrot.lane.b32.xlu0 %v273, 16
    %v295 = vpop.permute.xlu0 %294
    %vm300 = vcmask 261248
    %301 = vst.msk [vmem:[#allocation3 + $0x7] sm:$0xff] %vm300, %v289
    %302 = vst.msk [vmem:[#allocation3 + $0xf] sm:$0xff] %vm300, %v291
    %303 = vst.msk [vmem:[#allocation3 + $0x1f] sm:$0xff] %vm300, %v293
    %304 = vst.msk [vmem:[#allocation3 + $0x27] sm:$0xff] %vm300, %v295
    %305 = vrot.lane.b32.xlu0 %v270, 32
    %v306 = vpop.permute.xlu0 %305
    %307 = vrot.lane.b32.xlu0 %v271, 32
    %v308 = vpop.permute.xlu0 %307
    %309 = vrot.lane.b32.xlu0 %v272, 32
    %v310 = vpop.permute.xlu0 %309
    %311 = vrot.lane.b32.xlu0 %v273, 32
    %v312 = vpop.permute.xlu0 %311
    %vm317 = vcmask 392448
    %318 = vst.msk [vmem:[#allocation3 + $0x6] sm:$0xff] %vm317, %v306
    %319 = vst.msk [vmem:[#allocation3 + $0xe] sm:$0xff] %vm317, %v308
    %320 = vst.msk [vmem:[#allocation3 + $0x1e] sm:$0xff] %vm317, %v310
    %321 = vst.msk [vmem:[#allocation3 + $0x26] sm:$0xff] %vm317, %v312
    %322 = vrot.lane.b32.xlu0 %v270, 48
    %v323 = vpop.permute.xlu0 %322
    %324 = vrot.lane.b32.xlu0 %v271, 48
    %v325 = vpop.permute.xlu0 %324
    %326 = vrot.lane.b32.xlu0 %v272, 48
    %v327 = vpop.permute.xlu0 %326
    %328 = vrot.lane.b32.xlu0 %v273, 48
    %v329 = vpop.permute.xlu0 %328
    %vm334 = vcmask 523648
    %335 = vst.msk [vmem:[#allocation3 + $0x5] sm:$0xff] %vm334, %v323
    %336 = vst.msk [vmem:[#allocation3 + $0xd] sm:$0xff] %vm334, %v325
    %337 = vst.msk [vmem:[#allocation3 + $0x1d] sm:$0xff] %vm334, %v327
    %338 = vst.msk [vmem:[#allocation3 + $0x25] sm:$0xff] %vm334, %v329
    %339 = vrot.lane.b32.xlu0 %v270, 64
    %v340 = vpop.permute.xlu0 %339
    %341 = vrot.lane.b32.xlu0 %v271, 64
    %v342 = vpop.permute.xlu0 %341
    %343 = vrot.lane.b32.xlu0 %v272, 64
    %v344 = vpop.permute.xlu0 %343
    %345 = vrot.lane.b32.xlu0 %v273, 64
    %v346 = vpop.permute.xlu0 %345
    %vm351 = vcmask 654848
    %352 = vst.msk [vmem:[#allocation3 + $0x4] sm:$0xff] %vm351, %v340
    %353 = vst.msk [vmem:[#allocation3 + $0xc] sm:$0xff] %vm351, %v342
    %354 = vst.msk [vmem:[#allocation3 + $0x1c] sm:$0xff] %vm351, %v344
    %355 = vst.msk [vmem:[#allocation3 + $0x24] sm:$0xff] %vm351, %v346
    %356 = vrot.lane.b32.xlu0 %v270, 80
    %v357 = vpop.permute.xlu0 %356
    %358 = vrot.lane.b32.xlu0 %v271, 80
    %v359 = vpop.permute.xlu0 %358
    %360 = vrot.lane.b32.xlu0 %v272, 80
    %v361 = vpop.permute.xlu0 %360
    %362 = vrot.lane.b32.xlu0 %v273, 80
    %v363 = vpop.permute.xlu0 %362
    %vm368 = vcmask 786048
    %369 = vst.msk [vmem:[#allocation3 + $0x3] sm:$0xff] %vm368, %v357
    %370 = vst.msk [vmem:[#allocation3 + $0xb] sm:$0xff] %vm368, %v359
    %371 = vst.msk [vmem:[#allocation3 + $0x1b] sm:$0xff] %vm368, %v361
    %372 = vst.msk [vmem:[#allocation3 + $0x23] sm:$0xff] %vm368, %v363
    %373 = vrot.lane.b32.xlu0 %v270, 96
    %v374 = vpop.permute.xlu0 %373
    %375 = vrot.lane.b32.xlu0 %v271, 96
    %v376 = vpop.permute.xlu0 %375
    %377 = vrot.lane.b32.xlu0 %v272, 96
    %v378 = vpop.permute.xlu0 %377
    %379 = vrot.lane.b32.xlu0 %v273, 96
    %v380 = vpop.permute.xlu0 %379
    %vm385 = vcmask 917248
    %386 = vst.msk [vmem:[#allocation3 + $0x2] sm:$0xff] %vm385, %v374
    %387 = vst.msk [vmem:[#allocation3 + $0xa] sm:$0xff] %vm385, %v376
    %388 = vst.msk [vmem:[#allocation3 + $0x1a] sm:$0xff] %vm385, %v378
    %389 = vst.msk [vmem:[#allocation3 + $0x22] sm:$0xff] %vm385, %v380
    %v390 = vld [vmem:[#allocation3 + $0x5] sm:$0xff]
    %v391 = vld [vmem:[#allocation3 + $0xd] sm:$0xff]
    %v392 = vld [vmem:[#allocation3 + $0x1d] sm:$0xff]
    %v393 = vld [vmem:[#allocation3 + $0x25] sm:$0xff]
    %v394 = vpack.c.bf16 %v391, %v390
    %v395 = vpack.c.bf16 %v393, %v392
    %v396 = vld [vmem:[%s2] sm:$0xf]
    %v397 = vld [vmem:[%s2 + $0x4] sm:$0xf]
    %v398 = vld [vmem:[%s2 + $0x8] sm:$0xf]
    %v399 = vld [vmem:[%s2 + $0xc] sm:$0xf]
    %v400 = vld [vmem:[%s2 + $0x10] sm:$0xf]
    %v401 = vld [vmem:[%s2 + $0x14] sm:$0xf]
    %v402 = vld [vmem:[%s2 + $0x18] sm:$0xf]
    %v403 = vld [vmem:[%s2 + $0x1c] sm:$0xf]
    %v404 = vld [vmem:[%s2 + $0x20] sm:$0xf]
    %v405 = vld [vmem:[%s2 + $0x24] sm:$0xf]
    %v406 = vld [vmem:[%s2 + $0x28] sm:$0xf]
    %v407 = vld [vmem:[%s2 + $0x2c] sm:$0xf]
    %v408 = vld [vmem:[%s2 + $0x30] sm:$0xf]
    %v409 = vld [vmem:[%s2 + $0x34] sm:$0xf]
    %v424 = vunpack.c.l.b16 %v396
    %v425 = vunpack.c.l.b16 %v397
    %v426 = vunpack.c.l.b16 %v398
    %v427 = vunpack.c.l.b16 %v399
    %v428 = vunpack.c.l.b16 %v400
    %v429 = vunpack.c.l.b16 %v401
    %v430 = vunpack.c.l.b16 %v402
    %v431 = vunpack.c.l.b16 %v403
    %v432 = vunpack.c.l.b16 %v404
    %v433 = vunpack.c.l.b16 %v405
    %v434 = vunpack.c.l.b16 %v406
    %v435 = vunpack.c.l.b16 %v407
    %v436 = vunpack.c.l.b16 %v408
    %v437 = vunpack.c.l.b16 %v409
    %v438 = vpack.c.b16 %v425, %v424
    %v439 = vpack.c.b16 %v427, %v426
    %v440 = vpack.c.b16 %v429, %v428
    %v441 = vpack.c.b16 %v431, %v430
    %v442 = vpack.c.b16 %v433, %v432
    %v443 = vpack.c.b16 %v435, %v434
    %v444 = vpack.c.b16 %v437, %v436
    %v453 = vsel %vm274, %v394, 0
    %v456 = vsel %vm274, %v395, 0
    %458 = vmatprep.subr.bf16.mxu0 0
    %459 = vmatpush1.bf16.msra.mxu0 %v438
    %460 = vmatprep.subr.bf16.mxu0 0
    %461 = vmatpush1.bf16.msra.mxu0 %v439
    %462 = vmatprep.subr.bf16.mxu0 0
    %463 = vmatpush1.bf16.msra.mxu0 %v440
    %464 = vmatprep.subr.bf16.mxu0 0
    %465 = vmatpush1.bf16.msra.mxu0 %v441
    %466 = vmatprep.subr.bf16.mxu0 0
    %467 = vmatpush1.bf16.msra.mxu0 %v442
    %468 = vmatprep.subr.bf16.mxu0 0
    %469 = vmatpush1.bf16.msra.mxu0 %v443
    %470 = vmatprep.subr.bf16.mxu0 0
    %471 = vmatpush1.bf16.msra.mxu0 %v444
    %472 = vmatprep.subr.bf16.mxu0 0
    %473 = vmatpush1.bf16.msra.mxu0 0
    %474 = vmatprep.subr.bf16.mxu0 0
    %475 = vmatpush1.bf16.msra.mxu0 0
    %476 = vmatprep.subr.bf16.mxu0 0
    %477 = vmatpush1.bf16.msra.mxu0 0
    %478 = vmatprep.subr.bf16.mxu0 0
    %479 = vmatpush1.bf16.msra.mxu0 0
    %480 = vmatprep.subr.bf16.mxu0 0
    %481 = vmatpush1.bf16.msra.mxu0 0
    %482 = vmatprep.subr.bf16.mxu0 0
    %483 = vmatpush1.bf16.msra.mxu0 0
    %484 = vmatprep.subr.bf16.mxu0 0
    %485 = vmatpush1.bf16.msra.mxu0 0
    %486 = vmatprep.subr.bf16.mxu0 0
    %487 = vmatpush1.bf16.msra.mxu0 0
    %488 = vmatprep.subr.bf16.mxu0 0
    %489 = vmatpush1.bf16.msra.mxu0 0
    %490 = vmatprep.mubr.bf16.mxu0 0
    %491 = vmatmul.mubr.bf16.gmra.mrb[0].mxu0 %v453
    %v492 = vpop.f32.mrb[0].mxu0
    %v493 = vadd.f32 0.0, %v492
    %v494 = vpop.f32.mrb[0].mxu0
    %v495 = vpop.f32.mrb[0].mxu0
    %v496 = vadd.f32 0.0, %v495
    %v497 = vpop.f32.mrb[0].mxu0
    %498 = vmatprep.mubr.bf16.mxu0 0
    %499 = vmatmul.mubr.bf16.gmra.mrb[0].mxu0 %v456
    %v500 = vpop.f32.mrb[0].mxu0
    %v501 = vadd.f32 0.0, %v500
    %v502 = vpop.f32.mrb[0].mxu0
    %v503 = vpop.f32.mrb[0].mxu0
    %v504 = vadd.f32 0.0, %v503
    %v505 = vpop.f32.mrb[0].mxu0
    %506 = vdwg.mxu0
    %v507 = vld [vmem:[%s5 + $0x1] sm:$0x1]
    %v508 = vlaneseq
    %v509 = vshrl.u32 %v508, 7
    %v510 = vsub.s32 0, %v509
    %v511 = vrot.slane %v507, %v510
    %v512 = vmul.f32 %v493, %v511
    %v513 = vmul.f32 %v496, %v511
    %v514 = vmul.f32 %v501, %v511
    %v515 = vmul.f32 %v504, %v511
    %v516 = vld [vmem:[%s6 + $0x1] sm:$0x1]
    %v517 = vlaneseq
    %v518 = vshrl.u32 %v517, 7
    %v519 = vsub.s32 0, %v518
    %v520 = vrot.slane %v516, %v519
    %v521 = vadd.f32 %v512, %v520
    %v522 = vadd.f32 %v513, %v520
    %v523 = vadd.f32 %v514, %v520
    %v524 = vadd.f32 %v515, %v520
    %v525 = vmul.f32 %v521, 0.5
    %v526 = vmul.f32 %v522, 0.5
    %v527 = vmul.f32 %v523, 0.5
    %v528 = vmul.f32 %v524, 0.5
    %v529 = vmul.f32 %v521, 0.70710677
    %v530 = vmul.f32 %v522, 0.70710677
    %v531 = vmul.f32 %v523, 0.70710677
    %v532 = vmul.f32 %v524, 0.70710677
    %v533 = verf.f32.pop %v529
    %v534 = verf.f32.pop %v530
    %v535 = verf.f32.pop %v531
    %v536 = verf.f32.pop %v532
    %v537 = vadd.f32 %v533, 1.0
    %v538 = vadd.f32 %v534, 1.0
    %v539 = vadd.f32 %v535, 1.0
    %v540 = vadd.f32 %v536, 1.0
    %v541 = vmul.f32 %v525, %v537
    %v542 = vmul.f32 %v526, %v538
    %v543 = vmul.f32 %v527, %v539
    %v544 = vmul.f32 %v528, %v540
    %545 = vst [vmem:[#allocation4] sm:$0xff] 0.0
    %546 = vst [vmem:[#allocation4 + $0x20] sm:$0xff] 0.0
    %547 = vst [vmem:[#allocation4 + $0x10] sm:$0xff] 0.0
    %548 = vst [vmem:[#allocation4 + $0x18] sm:$0x1] 0.0
    %549 = vst [vmem:[#allocation4 + $0x30] sm:$0xff] 0.0
    %550 = vst [vmem:[#allocation4 + $0x38] sm:$0x1] 0.0
    %vm551 = vcmask 261120
    %552 = vst.msk [vmem:[#allocation4 + $0x8] sm:$0xff] %vm551, %v541
    %553 = vst.msk [vmem:[#allocation4 + $0x10] sm:$0xff] %vm551, %v542
    %554 = vst.msk [vmem:[#allocation4 + $0x28] sm:$0xff] %vm551, %v543
    %555 = vst.msk [vmem:[#allocation4 + $0x30] sm:$0xff] %vm551, %v544
    %560 = vrot.lane.b32.xlu0 %v541, 32
    %v561 = vpop.permute.xlu0 %560
    %562 = vrot.lane.b32.xlu0 %v542, 32
    %v563 = vpop.permute.xlu0 %562
    %564 = vrot.lane.b32.xlu0 %v543, 32
    %v565 = vpop.permute.xlu0 %564
    %566 = vrot.lane.b32.xlu0 %v544, 32
    %v567 = vpop.permute.xlu0 %566
    %vm572 = vcmask 523520
    %573 = vst.msk [vmem:[#allocation4 + $0x7] sm:$0xff] %vm572, %v561
    %574 = vst.msk [vmem:[#allocation4 + $0xf] sm:$0xff] %vm572, %v563
    %575 = vst.msk [vmem:[#allocation4 + $0x27] sm:$0xff] %vm572, %v565
    %576 = vst.msk [vmem:[#allocation4 + $0x2f] sm:$0xff] %vm572, %v567
    %577 = vrot.lane.b32.xlu0 %v541, 64
    %v578 = vpop.permute.xlu0 %577
    %579 = vrot.lane.b32.xlu0 %v542, 64
    %v580 = vpop.permute.xlu0 %579
    %581 = vrot.lane.b32.xlu0 %v543, 64
    %v582 = vpop.permute.xlu0 %581
    %583 = vrot.lane.b32.xlu0 %v544, 64
    %v584 = vpop.permute.xlu0 %583
    %vm589 = vcmask 785920
    %590 = vst.msk [vmem:[#allocation4 + $0x6] sm:$0xff] %vm589, %v578
    %591 = vst.msk [vmem:[#allocation4 + $0xe] sm:$0xff] %vm589, %v580
    %592 = vst.msk [vmem:[#allocation4 + $0x26] sm:$0xff] %vm589, %v582
    %593 = vst.msk [vmem:[#allocation4 + $0x2e] sm:$0xff] %vm589, %v584
    %594 = vrot.lane.b32.xlu0 %v541, 96
    %v595 = vpop.permute.xlu0 %594
    %596 = vrot.lane.b32.xlu0 %v542, 96
    %v597 = vpop.permute.xlu0 %596
    %598 = vrot.lane.b32.xlu0 %v543, 96
    %v599 = vpop.permute.xlu0 %598
    %600 = vrot.lane.b32.xlu0 %v544, 96
    %v601 = vpop.permute.xlu0 %600
    %vm606 = vcmask 1048320
    %607 = vst.msk [vmem:[#allocation4 + $0x5] sm:$0xff] %vm606, %v595
    %608 = vst.msk [vmem:[#allocation4 + $0xd] sm:$0xff] %vm606, %v597
    %609 = vst.msk [vmem:[#allocation4 + $0x25] sm:$0xff] %vm606, %v599
    %610 = vst.msk [vmem:[#allocation4 + $0x2d] sm:$0xff] %vm606, %v601
    %v611 = vld [vmem:[#allocation4 + $0x5] sm:$0xff]
    %v612 = vld [vmem:[#allocation4 + $0xd] sm:$0xff]
    %v613 = vld [vmem:[#allocation4 + $0x25] sm:$0xff]
    %v614 = vld [vmem:[#allocation4 + $0x2d] sm:$0xff]
    %v615 = vpack.c.bf16 %v612, %v611
    %v616 = vpack.c.bf16 %v614, %v613
    %v617 = vld [vmem:[%s3] sm:$0xf]
    %v618 = vld [vmem:[%s3 + $0x4] sm:$0xf]
    %v619 = vld [vmem:[%s3 + $0x8] sm:$0xf]
    %v620 = vld [vmem:[%s3 + $0xc] sm:$0xf]
    %v621 = vld [vmem:[%s3 + $0x10] sm:$0xf]
    %v622 = vld [vmem:[%s3 + $0x14] sm:$0xf]
    %v623 = vld [vmem:[%s3 + $0x18] sm:$0xf]
    %v624 = vld [vmem:[%s3 + $0x1c] sm:$0xf]
    %v625 = vld [vmem:[%s3 + $0x20] sm:$0xf]
    %v626 = vld [vmem:[%s3 + $0x24] sm:$0xf]
    %v627 = vld [vmem:[%s3 + $0x28] sm:$0xf]
    %v628 = vld [vmem:[%s3 + $0x2c] sm:$0xf]
    %v629 = vld [vmem:[%s3 + $0x30] sm:$0xf]
    %v630 = vld [vmem:[%s3 + $0x34] sm:$0xf]
    %v631 = vld [vmem:[%s3 + $0x38] sm:$0xf]
    %v632 = vld [vmem:[%s3 + $0x3c] sm:$0xf]
    %v633 = vld [vmem:[#allocation4 + $0x9] sm:$0xff]
    %v634 = vld [vmem:[#allocation4 + $0x11] sm:$0xff]
    %v635 = vld [vmem:[#allocation4 + $0x29] sm:$0xff]
    %v636 = vld [vmem:[#allocation4 + $0x31] sm:$0xff]
    %v637 = vpack.c.bf16 %v634, %v633
    %v638 = vpack.c.bf16 %v636, %v635
    %s639 = scalar_lea.vmem %s3, 64
    %v640 = vld [vmem:[%s639] sm:$0xf]
    %v641 = vld [vmem:[%s639 + $0x4] sm:$0xf]
    %v642 = vld [vmem:[%s639 + $0x8] sm:$0xf]
    %v643 = vld [vmem:[%s639 + $0xc] sm:$0xf]
    %v644 = vld [vmem:[%s639 + $0x10] sm:$0xf]
    %v645 = vld [vmem:[%s639 + $0x14] sm:$0xf]
    %v646 = vld [vmem:[%s639 + $0x18] sm:$0xf]
    %v647 = vld [vmem:[%s639 + $0x1c] sm:$0xf]
    %v648 = vld [vmem:[%s639 + $0x20] sm:$0xf]
    %v649 = vld [vmem:[%s639 + $0x24] sm:$0xf]
    %v650 = vld [vmem:[%s639 + $0x28] sm:$0xf]
    %v651 = vld [vmem:[%s639 + $0x2c] sm:$0xf]
    %v652 = vld [vmem:[%s639 + $0x30] sm:$0xf]
    %v653 = vld [vmem:[%s639 + $0x34] sm:$0xf]
    %v654 = vld [vmem:[%s639 + $0x38] sm:$0xf]
    %v655 = vld [vmem:[%s639 + $0x3c] sm:$0xf]
    %v672 = vunpack.c.l.b16 %v640
    %v673 = vunpack.c.l.b16 %v641
    %v674 = vunpack.c.l.b16 %v642
    %v675 = vunpack.c.l.b16 %v643
    %v676 = vunpack.c.l.b16 %v644
    %v677 = vunpack.c.l.b16 %v645
    %v678 = vunpack.c.l.b16 %v646
    %v679 = vunpack.c.l.b16 %v647
    %v680 = vunpack.c.l.b16 %v648
    %v681 = vunpack.c.l.b16 %v649
    %v682 = vunpack.c.l.b16 %v650
    %v683 = vunpack.c.l.b16 %v651
    %v684 = vunpack.c.l.b16 %v652
    %v685 = vunpack.c.l.b16 %v653
    %v686 = vunpack.c.l.b16 %v654
    %v687 = vunpack.c.l.b16 %v655
    %v688 = vpack.c.b16 %v673, %v672
    %v689 = vpack.c.b16 %v675, %v674
    %v690 = vpack.c.b16 %v677, %v676
    %v691 = vpack.c.b16 %v679, %v678
    %v692 = vpack.c.b16 %v681, %v680
    %v693 = vpack.c.b16 %v683, %v682
    %v694 = vpack.c.b16 %v685, %v684
    %v695 = vpack.c.b16 %v687, %v686
    %704 = vmatprep.subr.bf16.mxu0 0
    %705 = vmatpush1.bf16.msra.mxu0 %v688
    %706 = vmatprep.subr.bf16.mxu0 0
    %707 = vmatpush1.bf16.msra.mxu0 %v689
    %708 = vmatprep.subr.bf16.mxu0 0
    %709 = vmatpush1.bf16.msra.mxu0 %v690
    %710 = vmatprep.subr.bf16.mxu0 0
    %711 = vmatpush1.bf16.msra.mxu0 %v691
    %712 = vmatprep.subr.bf16.mxu0 0
    %713 = vmatpush1.bf16.msra.mxu0 %v692
    %714 = vmatprep.subr.bf16.mxu0 0
    %715 = vmatpush1.bf16.msra.mxu0 %v693
    %716 = vmatprep.subr.bf16.mxu0 0
    %717 = vmatpush1.bf16.msra.mxu0 %v694
    %718 = vmatprep.subr.bf16.mxu0 0
    %719 = vmatpush1.bf16.msra.mxu0 %v695
    %720 = vmatprep.subr.bf16.mxu0 0
    %721 = vmatpush1.bf16.msra.mxu0 0
    %722 = vmatprep.subr.bf16.mxu0 0
    %723 = vmatpush1.bf16.msra.mxu0 0
    %724 = vmatprep.subr.bf16.mxu0 0
    %725 = vmatpush1.bf16.msra.mxu0 0
    %726 = vmatprep.subr.bf16.mxu0 0
    %727 = vmatpush1.bf16.msra.mxu0 0
    %728 = vmatprep.subr.bf16.mxu0 0
    %729 = vmatpush1.bf16.msra.mxu0 0
    %730 = vmatprep.subr.bf16.mxu0 0
    %731 = vmatpush1.bf16.msra.mxu0 0
    %732 = vmatprep.subr.bf16.mxu0 0
    %733 = vmatpush1.bf16.msra.mxu0 0
    %734 = vmatprep.subr.bf16.mxu0 0
    %735 = vmatpush1.bf16.msra.mxu0 0
    %736 = vmatprep.mubr.bf16.mxu0 0
    %737 = vmatmul.mubr.bf16.gmra.mrb[0].mxu0 %v637
    %v738 = vpop.f32.mrb[0].mxu0
    %v739 = vadd.f32 0.0, %v738
    %v740 = vpop.f32.mrb[0].mxu0
    %v741 = vpop.f32.mrb[0].mxu0
    %v742 = vadd.f32 0.0, %v741
    %v743 = vpop.f32.mrb[0].mxu0
    %744 = vmatprep.mubr.bf16.mxu0 0
    %745 = vmatmul.mubr.bf16.gmra.mrb[0].mxu0 %v638
    %v746 = vpop.f32.mrb[0].mxu0
    %v747 = vadd.f32 0.0, %v746
    %v748 = vpop.f32.mrb[0].mxu0
    %v749 = vpop.f32.mrb[0].mxu0
    %v750 = vadd.f32 0.0, %v749
    %v751 = vpop.f32.mrb[0].mxu0
    %752 = vdwg.mxu0
    %v769 = vunpack.c.l.b16 %v617
    %v770 = vunpack.c.l.b16 %v618
    %v771 = vunpack.c.l.b16 %v619
    %v772 = vunpack.c.l.b16 %v620
    %v773 = vunpack.c.l.b16 %v621
    %v774 = vunpack.c.l.b16 %v622
    %v775 = vunpack.c.l.b16 %v623
    %v776 = vunpack.c.l.b16 %v624
    %v777 = vunpack.c.l.b16 %v625
    %v778 = vunpack.c.l.b16 %v626
    %v779 = vunpack.c.l.b16 %v627
    %v780 = vunpack.c.l.b16 %v628
    %v781 = vunpack.c.l.b16 %v629
    %v782 = vunpack.c.l.b16 %v630
    %v783 = vunpack.c.l.b16 %v631
    %v784 = vunpack.c.l.b16 %v632
    %v785 = vpack.c.b16 %v770, %v769
    %v786 = vpack.c.b16 %v772, %v771
    %v787 = vpack.c.b16 %v774, %v773
    %v788 = vpack.c.b16 %v776, %v775
    %v789 = vpack.c.b16 %v778, %v777
    %v790 = vpack.c.b16 %v780, %v779
    %v791 = vpack.c.b16 %v782, %v781
    %v792 = vpack.c.b16 %v784, %v783
    %801 = vmatprep.subr.bf16.mxu0 0
    %802 = vmatpush1.bf16.msra.mxu0 %v785
    %803 = vmatprep.subr.bf16.mxu0 0
    %804 = vmatpush1.bf16.msra.mxu0 %v786
    %805 = vmatprep.subr.bf16.mxu0 0
    %806 = vmatpush1.bf16.msra.mxu0 %v787
    %807 = vmatprep.subr.bf16.mxu0 0
    %808 = vmatpush1.bf16.msra.mxu0 %v788
    %809 = vmatprep.subr.bf16.mxu0 0
    %810 = vmatpush1.bf16.msra.mxu0 %v789
    %811 = vmatprep.subr.bf16.mxu0 0
    %812 = vmatpush1.bf16.msra.mxu0 %v790
    %813 = vmatprep.subr.bf16.mxu0 0
    %814 = vmatpush1.bf16.msra.mxu0 %v791
    %815 = vmatprep.subr.bf16.mxu0 0
    %816 = vmatpush1.bf16.msra.mxu0 %v792
    %817 = vmatprep.subr.bf16.mxu0 0
    %818 = vmatpush1.bf16.msra.mxu0 0
    %819 = vmatprep.subr.bf16.mxu0 0
    %820 = vmatpush1.bf16.msra.mxu0 0
    %821 = vmatprep.subr.bf16.mxu0 0
    %822 = vmatpush1.bf16.msra.mxu0 0
    %823 = vmatprep.subr.bf16.mxu0 0
    %824 = vmatpush1.bf16.msra.mxu0 0
    %825 = vmatprep.subr.bf16.mxu0 0
    %826 = vmatpush1.bf16.msra.mxu0 0
    %827 = vmatprep.subr.bf16.mxu0 0
    %828 = vmatpush1.bf16.msra.mxu0 0
    %829 = vmatprep.subr.bf16.mxu0 0
    %830 = vmatpush1.bf16.msra.mxu0 0
    %831 = vmatprep.subr.bf16.mxu0 0
    %832 = vmatpush1.bf16.msra.mxu0 0
    %833 = vmatprep.mubr.bf16.mxu0 0
    %834 = vmatmul.mubr.bf16.gmra.mrb[0].mxu0 %v615
    %v835 = vpop.f32.mrb[0].mxu0
    %v836 = vadd.f32 %v739, %v835
    %v837 = vpop.f32.mrb[0].mxu0
    %v838 = vpop.f32.mrb[0].mxu0
    %v839 = vadd.f32 %v742, %v838
    %v840 = vpop.f32.mrb[0].mxu0
    %841 = vmatprep.mubr.bf16.mxu0 0
    %842 = vmatmul.mubr.bf16.gmra.mrb[0].mxu0 %v616
    %v843 = vpop.f32.mrb[0].mxu0
    %v844 = vadd.f32 %v747, %v843
    %v845 = vpop.f32.mrb[0].mxu0
    %v846 = vpop.f32.mrb[0].mxu0
    %v847 = vadd.f32 %v750, %v846
    %v848 = vpop.f32.mrb[0].mxu0
    %849 = vdwg.mxu0
    %v850 = vld [vmem:[%s5 + $0x2] sm:$0x1]
    %v851 = vlaneseq
    %v852 = vshrl.u32 %v851, 7
    %v853 = vsub.s32 0, %v852
    %v854 = vrot.slane %v850, %v853
    %v855 = vmul.f32 %v836, %v854
    %v856 = vmul.f32 %v839, %v854
    %v857 = vmul.f32 %v844, %v854
    %v858 = vmul.f32 %v847, %v854
    %v859 = vld [vmem:[%s6 + $0x2] sm:$0x1]
    %v860 = vlaneseq
    %v861 = vshrl.u32 %v860, 7
    %v862 = vsub.s32 0, %v861
    %v863 = vrot.slane %v859, %v862
    %v864 = vadd.f32 %v855, %v863
    %v865 = vadd.f32 %v856, %v863
    %v866 = vadd.f32 %v857, %v863
    %v867 = vadd.f32 %v858, %v863
    %v868 = vmul.f32 %v864, 0.5
    %v869 = vmul.f32 %v865, 0.5
    %v870 = vmul.f32 %v866, 0.5
    %v871 = vmul.f32 %v867, 0.5
    %v872 = vmul.f32 %v864, 0.70710677
    %v873 = vmul.f32 %v865, 0.70710677
    %v874 = vmul.f32 %v866, 0.70710677
    %v875 = vmul.f32 %v867, 0.70710677
    %v876 = verf.f32.pop %v872
    %v877 = verf.f32.pop %v873
    %v878 = verf.f32.pop %v874
    %v879 = verf.f32.pop %v875
    %v880 = vadd.f32 %v876, 1.0
    %v881 = vadd.f32 %v877, 1.0
    %v882 = vadd.f32 %v878, 1.0
    %v883 = vadd.f32 %v879, 1.0
    %v884 = vmul.f32 %v868, %v880
    %v885 = vmul.f32 %v869, %v881
    %v886 = vmul.f32 %v870, %v882
    %v887 = vmul.f32 %v871, %v883
    %888 = vst [vmem:[#allocation5] sm:$0xff] 0.0
    %889 = vst [vmem:[#allocation5 + $0x20] sm:$0xff] 0.0
    %890 = vst [vmem:[#allocation5 + $0x10] sm:$0xff] 0.0
    %891 = vst [vmem:[#allocation5 + $0x18] sm:$0x7] 0.0
    %892 = vst [vmem:[#allocation5 + $0x30] sm:$0xff] 0.0
    %893 = vst [vmem:[#allocation5 + $0x38] sm:$0x7] 0.0
    %vm894 = vcmask 523264
    %895 = vst.msk [vmem:[#allocation5 + $0x8] sm:$0xff] %vm894, %v884
    %896 = vst.msk [vmem:[#allocation5 + $0x10] sm:$0xff] %vm894, %v885
    %897 = vst.msk [vmem:[#allocation5 + $0x28] sm:$0xff] %vm894, %v886
    %898 = vst.msk [vmem:[#allocation5 + $0x30] sm:$0xff] %vm894, %v887
    %903 = vrot.lane.b32.xlu0 %v884, 64
    %v904 = vpop.permute.xlu0 %903
    %905 = vrot.lane.b32.xlu0 %v885, 64
    %v906 = vpop.permute.xlu0 %905
    %907 = vrot.lane.b32.xlu0 %v886, 64
    %v908 = vpop.permute.xlu0 %907
    %909 = vrot.lane.b32.xlu0 %v887, 64
    %v910 = vpop.permute.xlu0 %909
    %vm915 = vcmask 1048064
    %916 = vst.msk [vmem:[#allocation5 + $0x7] sm:$0xff] %vm915, %v904
    %917 = vst.msk [vmem:[#allocation5 + $0xf] sm:$0xff] %vm915, %v906
    %918 = vst.msk [vmem:[#allocation5 + $0x27] sm:$0xff] %vm915, %v908
    %919 = vst.msk [vmem:[#allocation5 + $0x2f] sm:$0xff] %vm915, %v910
    %v920 = vld [vmem:[#allocation5 + $0x5] sm:$0xff]
    %v921 = vld [vmem:[#allocation5 + $0xd] sm:$0xff]
    %v922 = vld [vmem:[#allocation5 + $0x25] sm:$0xff]
    %v923 = vld [vmem:[#allocation5 + $0x2d] sm:$0xff]
    %v924 = vpack.c.bf16 %v921, %v920
    %v925 = vpack.c.bf16 %v923, %v922
    %v926 = vld [vmem:[%s4] sm:$0xf]
    %v927 = vld [vmem:[%s4 + $0x4] sm:$0xf]
    %v928 = vld [vmem:[%s4 + $0x8] sm:$0xf]
    %v929 = vld [vmem:[%s4 + $0xc] sm:$0xf]
    %v930 = vld [vmem:[%s4 + $0x10] sm:$0xf]
    %v931 = vld [vmem:[%s4 + $0x14] sm:$0xf]
    %v932 = vld [vmem:[%s4 + $0x18] sm:$0xf]
    %v933 = vld [vmem:[%s4 + $0x1c] sm:$0xf]
    %v934 = vld [vmem:[%s4 + $0x20] sm:$0xf]
    %v935 = vld [vmem:[%s4 + $0x24] sm:$0xf]
    %v936 = vld [vmem:[%s4 + $0x28] sm:$0xf]
    %v937 = vld [vmem:[%s4 + $0x2c] sm:$0xf]
    %v938 = vld [vmem:[%s4 + $0x30] sm:$0xf]
    %v939 = vld [vmem:[%s4 + $0x34] sm:$0xf]
    %v940 = vld [vmem:[%s4 + $0x38] sm:$0xf]
    %v941 = vld [vmem:[%s4 + $0x3c] sm:$0xf]
    %v942 = vld [vmem:[#allocation5 + $0x7] sm:$0xff]
    %v943 = vld [vmem:[#allocation5 + $0xf] sm:$0xff]
    %v944 = vld [vmem:[#allocation5 + $0x27] sm:$0xff]
    %v945 = vld [vmem:[#allocation5 + $0x2f] sm:$0xff]
    %v946 = vpack.c.bf16 %v943, %v942
    %v947 = vpack.c.bf16 %v945, %v944
    %s948 = scalar_lea.vmem %s4, 64
    %v949 = vld [vmem:[%s948] sm:$0xf]
    %v950 = vld [vmem:[%s948 + $0x4] sm:$0xf]
    %v951 = vld [vmem:[%s948 + $0x8] sm:$0xf]
    %v952 = vld [vmem:[%s948 + $0xc] sm:$0xf]
    %v953 = vld [vmem:[%s948 + $0x10] sm:$0xf]
    %v954 = vld [vmem:[%s948 + $0x14] sm:$0xf]
    %v955 = vld [vmem:[%s948 + $0x18] sm:$0xf]
    %v956 = vld [vmem:[%s948 + $0x1c] sm:$0xf]
    %v957 = vld [vmem:[%s948 + $0x20] sm:$0xf]
    %v958 = vld [vmem:[%s948 + $0x24] sm:$0xf]
    %v959 = vld [vmem:[%s948 + $0x28] sm:$0xf]
    %v960 = vld [vmem:[%s948 + $0x2c] sm:$0xf]
    %v961 = vld [vmem:[%s948 + $0x30] sm:$0xf]
    %v962 = vld [vmem:[%s948 + $0x34] sm:$0xf]
    %v963 = vld [vmem:[%s948 + $0x38] sm:$0xf]
    %v964 = vld [vmem:[%s948 + $0x3c] sm:$0xf]
    %v981 = vunpack.c.l.b16 %v949
    %v982 = vunpack.c.l.b16 %v950
    %v983 = vunpack.c.l.b16 %v951
    %v984 = vunpack.c.l.b16 %v952
    %v985 = vunpack.c.l.b16 %v953
    %v986 = vunpack.c.l.b16 %v954
    %v987 = vunpack.c.l.b16 %v955
    %v988 = vunpack.c.l.b16 %v956
    %v989 = vunpack.c.l.b16 %v957
    %v990 = vunpack.c.l.b16 %v958
    %v991 = vunpack.c.l.b16 %v959
    %v992 = vunpack.c.l.b16 %v960
    %v993 = vunpack.c.l.b16 %v961
    %v994 = vunpack.c.l.b16 %v962
    %v995 = vunpack.c.l.b16 %v963
    %v996 = vunpack.c.l.b16 %v964
    %v997 = vpack.c.b16 %v982, %v981
    %v998 = vpack.c.b16 %v984, %v983
    %v999 = vpack.c.b16 %v986, %v985
    %v1000 = vpack.c.b16 %v988, %v987
    %v1001 = vpack.c.b16 %v990, %v989
    %v1002 = vpack.c.b16 %v992, %v991
    %v1003 = vpack.c.b16 %v994, %v993
    %v1004 = vpack.c.b16 %v996, %v995
    %1013 = vmatprep.subr.bf16.mxu0 0
    %1014 = vmatpush1.bf16.msra.mxu0 %v997
    %1015 = vmatprep.subr.bf16.mxu0 0
    %1016 = vmatpush1.bf16.msra.mxu0 %v998
    %1017 = vmatprep.subr.bf16.mxu0 0
    %1018 = vmatpush1.bf16.msra.mxu0 %v999
    %1019 = vmatprep.subr.bf16.mxu0 0
    %1020 = vmatpush1.bf16.msra.mxu0 %v1000
    %1021 = vmatprep.subr.bf16.mxu0 0
    %1022 = vmatpush1.bf16.msra.mxu0 %v1001
    %1023 = vmatprep.subr.bf16.mxu0 0
    %1024 = vmatpush1.bf16.msra.mxu0 %v1002
    %1025 = vmatprep.subr.bf16.mxu0 0
    %1026 = vmatpush1.bf16.msra.mxu0 %v1003
    %1027 = vmatprep.subr.bf16.mxu0 0
    %1028 = vmatpush1.bf16.msra.mxu0 %v1004
    %1029 = vmatprep.subr.bf16.mxu0 0
    %1030 = vmatpush1.bf16.msra.mxu0 0
    %1031 = vmatprep.subr.bf16.mxu0 0
    %1032 = vmatpush1.bf16.msra.mxu0 0
    %1033 = vmatprep.subr.bf16.mxu0 0
    %1034 = vmatpush1.bf16.msra.mxu0 0
    %1035 = vmatprep.subr.bf16.mxu0 0
    %1036 = vmatpush1.bf16.msra.mxu0 0
    %1037 = vmatprep.subr.bf16.mxu0 0
    %1038 = vmatpush1.bf16.msra.mxu0 0
    %1039 = vmatprep.subr.bf16.mxu0 0
    %1040 = vmatpush1.bf16.msra.mxu0 0
    %1041 = vmatprep.subr.bf16.mxu0 0
    %1042 = vmatpush1.bf16.msra.mxu0 0
    %1043 = vmatprep.subr.bf16.mxu0 0
    %1044 = vmatpush1.bf16.msra.mxu0 0
    %1045 = vmatprep.mubr.bf16.mxu0 0
    %1046 = vmatmul.mubr.bf16.gmra.mrb[0].mxu0 %v946
    %v1047 = vpop.f32.mrb[0].mxu0
    %v1048 = vadd.f32 0.0, %v1047
    %v1049 = vpop.f32.mrb[0].mxu0
    %v1050 = vpop.f32.mrb[0].mxu0
    %v1051 = vadd.f32 0.0, %v1050
    %v1052 = vpop.f32.mrb[0].mxu0
    %1053 = vmatprep.mubr.bf16.mxu0 0
    %1054 = vmatmul.mubr.bf16.gmra.mrb[0].mxu0 %v947
    %v1055 = vpop.f32.mrb[0].mxu0
    %v1056 = vadd.f32 0.0, %v1055
    %v1057 = vpop.f32.mrb[0].mxu0
    %v1058 = vpop.f32.mrb[0].mxu0
    %v1059 = vadd.f32 0.0, %v1058
    %v1060 = vpop.f32.mrb[0].mxu0
    %1061 = vdwg.mxu0
    %v1078 = vunpack.c.l.b16 %v926
    %v1079 = vunpack.c.l.b16 %v927
    %v1080 = vunpack.c.l.b16 %v928
    %v1081 = vunpack.c.l.b16 %v929
    %v1082 = vunpack.c.l.b16 %v930
    %v1083 = vunpack.c.l.b16 %v931
    %v1084 = vunpack.c.l.b16 %v932
    %v1085 = vunpack.c.l.b16 %v933
    %v1086 = vunpack.c.l.b16 %v934
    %v1087 = vunpack.c.l.b16 %v935
    %v1088 = vunpack.c.l.b16 %v936
    %v1089 = vunpack.c.l.b16 %v937
    %v1090 = vunpack.c.l.b16 %v938
    %v1091 = vunpack.c.l.b16 %v939
    %v1092 = vunpack.c.l.b16 %v940
    %v1093 = vunpack.c.l.b16 %v941
    %v1094 = vpack.c.b16 %v1079, %v1078
    %v1095 = vpack.c.b16 %v1081, %v1080
    %v1096 = vpack.c.b16 %v1083, %v1082
    %v1097 = vpack.c.b16 %v1085, %v1084
    %v1098 = vpack.c.b16 %v1087, %v1086
    %v1099 = vpack.c.b16 %v1089, %v1088
    %v1100 = vpack.c.b16 %v1091, %v1090
    %v1101 = vpack.c.b16 %v1093, %v1092
    %1110 = vmatprep.subr.bf16.mxu0 0
    %1111 = vmatpush1.bf16.msra.mxu0 %v1094
    %1112 = vmatprep.subr.bf16.mxu0 0
    %1113 = vmatpush1.bf16.msra.mxu0 %v1095
    %1114 = vmatprep.subr.bf16.mxu0 0
    %1115 = vmatpush1.bf16.msra.mxu0 %v1096
    %1116 = vmatprep.subr.bf16.mxu0 0
    %1117 = vmatpush1.bf16.msra.mxu0 %v1097
    %1118 = vmatprep.subr.bf16.mxu0 0
    %1119 = vmatpush1.bf16.msra.mxu0 %v1098
    %1120 = vmatprep.subr.bf16.mxu0 0
    %1121 = vmatpush1.bf16.msra.mxu0 %v1099
    %1122 = vmatprep.subr.bf16.mxu0 0
    %1123 = vmatpush1.bf16.msra.mxu0 %v1100
    %1124 = vmatprep.subr.bf16.mxu0 0
    %1125 = vmatpush1.bf16.msra.mxu0 %v1101
    %1126 = vmatprep.subr.bf16.mxu0 0
    %1127 = vmatpush1.bf16.msra.mxu0 0
    %1128 = vmatprep.subr.bf16.mxu0 0
    %1129 = vmatpush1.bf16.msra.mxu0 0
    %1130 = vmatprep.subr.bf16.mxu0 0
    %1131 = vmatpush1.bf16.msra.mxu0 0
    %1132 = vmatprep.subr.bf16.mxu0 0
    %1133 = vmatpush1.bf16.msra.mxu0 0
    %1134 = vmatprep.subr.bf16.mxu0 0
    %1135 = vmatpush1.bf16.msra.mxu0 0
    %1136 = vmatprep.subr.bf16.mxu0 0
    %1137 = vmatpush1.bf16.msra.mxu0 0
    %1138 = vmatprep.subr.bf16.mxu0 0
    %1139 = vmatpush1.bf16.msra.mxu0 0
    %1140 = vmatprep.subr.bf16.mxu0 0
    %1141 = vmatpush1.bf16.msra.mxu0 0
    %1142 = vmatprep.mubr.bf16.mxu0 0
    %1143 = vmatmul.mubr.bf16.gmra.mrb[0].mxu0 %v924
    %v1144 = vpop.f32.mrb[0].mxu0
    %v1145 = vadd.f32 %v1048, %v1144
    %v1146 = vpop.f32.mrb[0].mxu0
    %v1147 = vpop.f32.mrb[0].mxu0
    %v1148 = vadd.f32 %v1051, %v1147
    %v1149 = vpop.f32.mrb[0].mxu0
    %1150 = vmatprep.mubr.bf16.mxu0 0
    %1151 = vmatmul.mubr.bf16.gmra.mrb[0].mxu0 %v925
    %v1152 = vpop.f32.mrb[0].mxu0
    %v1153 = vadd.f32 %v1056, %v1152
    %v1154 = vpop.f32.mrb[0].mxu0
    %v1155 = vpop.f32.mrb[0].mxu0
    %v1156 = vadd.f32 %v1059, %v1155
    %v1157 = vpop.f32.mrb[0].mxu0
    %1158 = vdwg.mxu0
    %v1159 = vld [vmem:[#allocation5 + $0x9] sm:$0xff]
    %v1160 = vld [vmem:[#allocation5 + $0x11] sm:$0xff]
    %v1161 = vld [vmem:[#allocation5 + $0x29] sm:$0xff]
    %v1162 = vld [vmem:[#allocation5 + $0x31] sm:$0xff]
    %v1163 = vpack.c.bf16 %v1160, %v1159
    %v1164 = vpack.c.bf16 %v1162, %v1161
    %s1165 = scalar_lea.vmem %s4, 128
    %v1166 = vld [vmem:[%s1165] sm:$0xf]
    %v1167 = vld [vmem:[%s1165 + $0x4] sm:$0xf]
    %v1168 = vld [vmem:[%s1165 + $0x8] sm:$0xf]
    %v1169 = vld [vmem:[%s1165 + $0xc] sm:$0xf]
    %v1170 = vld [vmem:[%s1165 + $0x10] sm:$0xf]
    %v1171 = vld [vmem:[%s1165 + $0x14] sm:$0xf]
    %v1172 = vld [vmem:[%s1165 + $0x18] sm:$0xf]
    %v1173 = vld [vmem:[%s1165 + $0x1c] sm:$0xf]
    %v1174 = vld [vmem:[%s1165 + $0x20] sm:$0xf]
    %v1175 = vld [vmem:[%s1165 + $0x24] sm:$0xf]
    %v1176 = vld [vmem:[%s1165 + $0x28] sm:$0xf]
    %v1177 = vld [vmem:[%s1165 + $0x2c] sm:$0xf]
    %v1178 = vld [vmem:[%s1165 + $0x30] sm:$0xf]
    %v1179 = vld [vmem:[%s1165 + $0x34] sm:$0xf]
    %v1180 = vld [vmem:[%s1165 + $0x38] sm:$0xf]
    %v1181 = vld [vmem:[%s1165 + $0x3c] sm:$0xf]
    %v1198 = vunpack.c.l.b16 %v1166
    %v1199 = vunpack.c.l.b16 %v1167
    %v1200 = vunpack.c.l.b16 %v1168
    %v1201 = vunpack.c.l.b16 %v1169
    %v1202 = vunpack.c.l.b16 %v1170
    %v1203 = vunpack.c.l.b16 %v1171
    %v1204 = vunpack.c.l.b16 %v1172
    %v1205 = vunpack.c.l.b16 %v1173
    %v1206 = vunpack.c.l.b16 %v1174
    %v1207 = vunpack.c.l.b16 %v1175
    %v1208 = vunpack.c.l.b16 %v1176
    %v1209 = vunpack.c.l.b16 %v1177
    %v1210 = vunpack.c.l.b16 %v1178
    %v1211 = vunpack.c.l.b16 %v1179
    %v1212 = vunpack.c.l.b16 %v1180
    %v1213 = vunpack.c.l.b16 %v1181
    %v1214 = vpack.c.b16 %v1199, %v1198
    %v1215 = vpack.c.b16 %v1201, %v1200
    %v1216 = vpack.c.b16 %v1203, %v1202
    %v1217 = vpack.c.b16 %v1205, %v1204
    %v1218 = vpack.c.b16 %v1207, %v1206
    %v1219 = vpack.c.b16 %v1209, %v1208
    %v1220 = vpack.c.b16 %v1211, %v1210
    %v1221 = vpack.c.b16 %v1213, %v1212
    %1230 = vmatprep.subr.bf16.mxu0 0
    %1231 = vmatpush1.bf16.msra.mxu0 %v1214
    %1232 = vmatprep.subr.bf16.mxu0 0
    %1233 = vmatpush1.bf16.msra.mxu0 %v1215
    %1234 = vmatprep.subr.bf16.mxu0 0
    %1235 = vmatpush1.bf16.msra.mxu0 %v1216
    %1236 = vmatprep.subr.bf16.mxu0 0
    %1237 = vmatpush1.bf16.msra.mxu0 %v1217
    %1238 = vmatprep.subr.bf16.mxu0 0
    %1239 = vmatpush1.bf16.msra.mxu0 %v1218
    %1240 = vmatprep.subr.bf16.mxu0 0
    %1241 = vmatpush1.bf16.msra.mxu0 %v1219
    %1242 = vmatprep.subr.bf16.mxu0 0
    %1243 = vmatpush1.bf16.msra.mxu0 %v1220
    %1244 = vmatprep.subr.bf16.mxu0 0
    %1245 = vmatpush1.bf16.msra.mxu0 %v1221
    %1246 = vmatprep.subr.bf16.mxu0 0
    %1247 = vmatpush1.bf16.msra.mxu0 0
    %1248 = vmatprep.subr.bf16.mxu0 0
    %1249 = vmatpush1.bf16.msra.mxu0 0
    %1250 = vmatprep.subr.bf16.mxu0 0
    %1251 = vmatpush1.bf16.msra.mxu0 0
    %1252 = vmatprep.subr.bf16.mxu0 0
    %1253 = vmatpush1.bf16.msra.mxu0 0
    %1254 = vmatprep.subr.bf16.mxu0 0
    %1255 = vmatpush1.bf16.msra.mxu0 0
    %1256 = vmatprep.subr.bf16.mxu0 0
    %1257 = vmatpush1.bf16.msra.mxu0 0
    %1258 = vmatprep.subr.bf16.mxu0 0
    %1259 = vmatpush1.bf16.msra.mxu0 0
    %1260 = vmatprep.subr.bf16.mxu0 0
    %1261 = vmatpush1.bf16.msra.mxu0 0
    %1262 = vmatprep.mubr.bf16.mxu0 0
    %1263 = vmatmul.mubr.bf16.gmra.mrb[0].mxu0 %v1163
    %v1264 = vpop.f32.mrb[0].mxu0
    %v1265 = vadd.f32 0.0, %v1264
    %v1266 = vpop.f32.mrb[0].mxu0
    %v1267 = vpop.f32.mrb[0].mxu0
    %v1268 = vadd.f32 0.0, %v1267
    %v1269 = vpop.f32.mrb[0].mxu0
    %1270 = vmatprep.mubr.bf16.mxu0 0
    %1271 = vmatmul.mubr.bf16.gmra.mrb[0].mxu0 %v1164
    %v1272 = vpop.f32.mrb[0].mxu0
    %v1273 = vadd.f32 0.0, %v1272
    %v1274 = vpop.f32.mrb[0].mxu0
    %v1275 = vpop.f32.mrb[0].mxu0
    %v1276 = vadd.f32 0.0, %v1275
    %v1277 = vpop.f32.mrb[0].mxu0
    %1278 = vdwg.mxu0
    %v1279 = vadd.f32 %v1145, %v1265
    %v1280 = vadd.f32 %v1148, %v1268
    %v1281 = vadd.f32 %v1153, %v1273
    %v1282 = vadd.f32 %v1156, %v1276
    %v1283 = vld [vmem:[#allocation5 + $0xb] sm:$0xff]
    %v1284 = vld [vmem:[#allocation5 + $0x13] sm:$0xff]
    %v1285 = vld [vmem:[#allocation5 + $0x2b] sm:$0xff]
    %v1286 = vld [vmem:[#allocation5 + $0x33] sm:$0xff]
    %v1287 = vpack.c.bf16 %v1284, %v1283
    %v1288 = vpack.c.bf16 %v1286, %v1285
    %s1289 = scalar_lea.vmem %s4, 192
    %v1290 = vld [vmem:[%s1289] sm:$0xf]
    %v1291 = vld [vmem:[%s1289 + $0x4] sm:$0xf]
    %v1292 = vld [vmem:[%s1289 + $0x8] sm:$0xf]
    %v1293 = vld [vmem:[%s1289 + $0xc] sm:$0xf]
    %v1294 = vld [vmem:[%s1289 + $0x10] sm:$0xf]
    %v1295 = vld [vmem:[%s1289 + $0x14] sm:$0xf]
    %v1296 = vld [vmem:[%s1289 + $0x18] sm:$0xf]
    %v1297 = vld [vmem:[%s1289 + $0x1c] sm:$0xf]
    %v1298 = vld [vmem:[%s1289 + $0x20] sm:$0xf]
    %v1299 = vld [vmem:[%s1289 + $0x24] sm:$0xf]
    %v1300 = vld [vmem:[%s1289 + $0x28] sm:$0xf]
    %v1301 = vld [vmem:[%s1289 + $0x2c] sm:$0xf]
    %v1302 = vld [vmem:[%s1289 + $0x30] sm:$0xf]
    %v1303 = vld [vmem:[%s1289 + $0x34] sm:$0xf]
    %v1304 = vld [vmem:[%s1289 + $0x38] sm:$0xf]
    %v1305 = vld [vmem:[%s1289 + $0x3c] sm:$0xf]
    %v1322 = vunpack.c.l.b16 %v1290
    %v1323 = vunpack.c.l.b16 %v1291
    %v1324 = vunpack.c.l.b16 %v1292
    %v1325 = vunpack.c.l.b16 %v1293
    %v1326 = vunpack.c.l.b16 %v1294
    %v1327 = vunpack.c.l.b16 %v1295
    %v1328 = vunpack.c.l.b16 %v1296
    %v1329 = vunpack.c.l.b16 %v1297
    %v1330 = vunpack.c.l.b16 %v1298
    %v1331 = vunpack.c.l.b16 %v1299
    %v1332 = vunpack.c.l.b16 %v1300
    %v1333 = vunpack.c.l.b16 %v1301
    %v1334 = vunpack.c.l.b16 %v1302
    %v1335 = vunpack.c.l.b16 %v1303
    %v1336 = vunpack.c.l.b16 %v1304
    %v1337 = vunpack.c.l.b16 %v1305
    %v1338 = vpack.c.b16 %v1323, %v1322
    %v1339 = vpack.c.b16 %v1325, %v1324
    %v1340 = vpack.c.b16 %v1327, %v1326
    %v1341 = vpack.c.b16 %v1329, %v1328
    %v1342 = vpack.c.b16 %v1331, %v1330
    %v1343 = vpack.c.b16 %v1333, %v1332
    %v1344 = vpack.c.b16 %v1335, %v1334
    %v1345 = vpack.c.b16 %v1337, %v1336
    %1354 = vmatprep.subr.bf16.mxu0 0
    %1355 = vmatpush1.bf16.msra.mxu0 %v1338
    %1356 = vmatprep.subr.bf16.mxu0 0
    %1357 = vmatpush1.bf16.msra.mxu0 %v1339
    %1358 = vmatprep.subr.bf16.mxu0 0
    %1359 = vmatpush1.bf16.msra.mxu0 %v1340
    %1360 = vmatprep.subr.bf16.mxu0 0
    %1361 = vmatpush1.bf16.msra.mxu0 %v1341
    %1362 = vmatprep.subr.bf16.mxu0 0
    %1363 = vmatpush1.bf16.msra.mxu0 %v1342
    %1364 = vmatprep.subr.bf16.mxu0 0
    %1365 = vmatpush1.bf16.msra.mxu0 %v1343
    %1366 = vmatprep.subr.bf16.mxu0 0
    %1367 = vmatpush1.bf16.msra.mxu0 %v1344
    %1368 = vmatprep.subr.bf16.mxu0 0
    %1369 = vmatpush1.bf16.msra.mxu0 %v1345
    %1370 = vmatprep.subr.bf16.mxu0 0
    %1371 = vmatpush1.bf16.msra.mxu0 0
    %1372 = vmatprep.subr.bf16.mxu0 0
    %1373 = vmatpush1.bf16.msra.mxu0 0
    %1374 = vmatprep.subr.bf16.mxu0 0
    %1375 = vmatpush1.bf16.msra.mxu0 0
    %1376 = vmatprep.subr.bf16.mxu0 0
    %1377 = vmatpush1.bf16.msra.mxu0 0
    %1378 = vmatprep.subr.bf16.mxu0 0
    %1379 = vmatpush1.bf16.msra.mxu0 0
    %1380 = vmatprep.subr.bf16.mxu0 0
    %1381 = vmatpush1.bf16.msra.mxu0 0
    %1382 = vmatprep.subr.bf16.mxu0 0
    %1383 = vmatpush1.bf16.msra.mxu0 0
    %1384 = vmatprep.subr.bf16.mxu0 0
    %1385 = vmatpush1.bf16.msra.mxu0 0
    %1386 = vmatprep.mubr.bf16.mxu0 0
    %1387 = vmatmul.mubr.bf16.gmra.mrb[0].mxu0 %v1287
    %v1388 = vpop.f32.mrb[0].mxu0
    %v1389 = vadd.f32 0.0, %v1388
    %v1390 = vpop.f32.mrb[0].mxu0
    %v1391 = vpop.f32.mrb[0].mxu0
    %v1392 = vadd.f32 0.0, %v1391
    %v1393 = vpop.f32.mrb[0].mxu0
    %1394 = vmatprep.mubr.bf16.mxu0 0
    %1395 = vmatmul.mubr.bf16.gmra.mrb[0].mxu0 %v1288
    %v1396 = vpop.f32.mrb[0].mxu0
    %v1397 = vadd.f32 0.0, %v1396
    %v1398 = vpop.f32.mrb[0].mxu0
    %v1399 = vpop.f32.mrb[0].mxu0
    %v1400 = vadd.f32 0.0, %v1399
    %v1401 = vpop.f32.mrb[0].mxu0
    %1402 = vdwg.mxu0
    %v1403 = vadd.f32 %v1279, %v1389
    %v1404 = vadd.f32 %v1280, %v1392
    %v1405 = vadd.f32 %v1281, %v1397
    %v1406 = vadd.f32 %v1282, %v1400
    %v1407 = vld [vmem:[%s5 + $0x3] sm:$0x1]
    %v1408 = vlaneseq
    %v1409 = vshrl.u32 %v1408, 7
    %v1410 = vsub.s32 0, %v1409
    %v1411 = vrot.slane %v1407, %v1410
    %v1412 = vmul.f32 %v1403, %v1411
    %v1413 = vmul.f32 %v1404, %v1411
    %v1414 = vmul.f32 %v1405, %v1411
    %v1415 = vmul.f32 %v1406, %v1411
    %v1416 = vld [vmem:[%s6 + $0x3] sm:$0x1]
    %v1417 = vlaneseq
    %v1418 = vshrl.u32 %v1417, 7
    %v1419 = vsub.s32 0, %v1418
    %v1420 = vrot.slane %v1416, %v1419
    %v1421 = vadd.f32 %v1412, %v1420
    %v1422 = vadd.f32 %v1413, %v1420
    %v1423 = vadd.f32 %v1414, %v1420
    %v1424 = vadd.f32 %v1415, %v1420
    %v1425 = vmul.f32 %v1421, 0.5
    %v1426 = vmul.f32 %v1422, 0.5
    %v1427 = vmul.f32 %v1423, 0.5
    %v1428 = vmul.f32 %v1424, 0.5
    %v1429 = vmul.f32 %v1421, 0.70710677
    %v1430 = vmul.f32 %v1422, 0.70710677
    %v1431 = vmul.f32 %v1423, 0.70710677
    %v1432 = vmul.f32 %v1424, 0.70710677
    %v1433 = verf.f32.pop %v1429
    %v1434 = verf.f32.pop %v1430
    %v1435 = verf.f32.pop %v1431
    %v1436 = verf.f32.pop %v1432
    %v1437 = vadd.f32 %v1433, 1.0
    %v1438 = vadd.f32 %v1434, 1.0
    %v1439 = vadd.f32 %v1435, 1.0
    %v1440 = vadd.f32 %v1436, 1.0
    %v1441 = vmul.f32 %v1425, %v1437
    %v1442 = vmul.f32 %v1426, %v1438
    %v1443 = vmul.f32 %v1427, %v1439
    %v1444 = vmul.f32 %v1428, %v1440
    %1445 = vst [vmem:[#allocation6] sm:$0xff] %v1441
    %1446 = vst [vmem:[#allocation6 + $0x8] sm:$0xff] %v1442
    %1447 = vst [vmem:[#allocation6 + $0x10] sm:$0xff] %v1443
    %1448 = vst [vmem:[#allocation6 + $0x18] sm:$0xff] %v1444
    // Predicated region
    $region30: #{cnn_encoder_forward.1} parent=1 // pred_check
      _
    $region31: #{cnn_encoder_forward.1} parent=1 // pred_check_branch
      %1450 = sbr.rel (0) target = $region33
    $region32: #{cnn_encoder_forward.1} parent=1 // pred_region
      %s1452 = ssub.s32 512, 512
      %1453 = vsyncadd [#allocation7], %s1452
      %s1454 = sshll.u32 [#allocation6], 4
      %s1455 = int_to_ptr.vmem [resolvable:$true] %s1454
      %1460 = dma.vmem_to_hbm [thread:$0]  %s1455, 512, %s7, [#allocation7], 128, 128, 8
    $region33: #{cnn_encoder_forward.1} parent=1 // pred_fallthru
      _
    // Predicated region
    $region34: #{cnn_encoder_forward.1} parent=1 // pred_check
      _
    $region35: #{cnn_encoder_forward.1} parent=1 // pred_check_branch
      %1462 = sbr.rel (0) target = $region37
    $region36: #{cnn_encoder_forward.1} parent=1 // pred_region
      %1463 = dma.done [#allocation7], 512
    $region37: #{cnn_encoder_forward.1} parent=1 // pred_fallthru
      _
    %1464 = vsyncpa [#allocation7], 1

</llo_original>
